<compile_context>
chip_gen: v7x
topology: tpu7x:2x2x1
jax: 0.10.0
libtpu: 0.0.40
codegen_flags: <defaults>
</compile_context>

<pallas_src>
import jax
import jax.numpy as jnp
from jax import lax
from jax.experimental import pallas as pl
from jax.experimental.pallas import tpu as pltpu

INPUT_DIM = 6
D_PAD = 8            # input dim zero-padded to one sublane tile
D_MODEL = 32
NLAYERS = 2          # kernel is hard-wired to the module default of 2 layers
LN_EPS = 1e-5
MAX_UNROLL = 8       # timesteps per inner (statically unrolled) chunk


def _largest_divisor_leq(n, m):
    for u in range(min(n, m), 0, -1):
        if n % u == 0:
            return u
    return 1


def lstm_encoder_kernel(x_ref, wih0_ref, b0_ref, wtop_ref, whh1_ref, b1_ref,
                        lnw_ref, lnb_ref, o_ref):
    H = D_MODEL
    G = 4 * H                         # 128 gate lanes per layer
    TB = o_ref.shape[0]               # batch tile (multiple of 8)
    T = x_ref.shape[0] // TB          # x_ref is (T*TB, D_PAD), time-major
    U = _largest_divisor_leq(T, MAX_UNROLL)
    n_chunks = T // U
    f32 = jnp.float32

    # Loop-invariant weight loads (hoisted once).
    wih0 = wih0_ref[...]              # (8, 128)   layer-0 input weights (padded)
    b0 = b0_ref[...]                  # (1, 128)   b_ih0 + b_hh0
    wtop = wtop_ref[...]              # (32, 256)  [whh0 | wih1]
    whh1 = whh1_ref[...]              # (32, 128)
    b1 = b1_ref[...]                  # (1, 128)   b_ih1 + b_hh1

    # Hoisted per-lane constants: gate order [i, f, g, o]; lanes [2H,3H) take
    # tanh, all others sigmoid via sigmoid(x) = 0.5*tanh(x/2) + 0.5, so each
    # gate tensor needs a single tanh pass on the EUP.
    lane = lax.broadcasted_iota(jnp.int32, (1, G), 1)
    is_g = (lane >= 2 * H) & (lane < 3 * H)
    s_vec = jnp.where(is_g, 1.0, 0.5).astype(f32)   # pre-scale == post-scale
    a_vec = jnp.where(is_g, 0.0, 0.5).astype(f32)   # post-offset

    def activate(gates):                              # (TB, 128) -> (TB, 128)
        y = jnp.tanh(gates * s_vec)
        return y * s_vec + a_vec

    def cell(act, c):
        i = act[:, 0 * H:1 * H]
        f = act[:, 1 * H:2 * H]
        g = act[:, 2 * H:3 * H]
        o = act[:, 3 * H:4 * H]
        c_new = f * c + i * g
        h_new = o * jnp.tanh(c_new)
        return h_new, c_new

    def chunk(ch, carry):
        h1, h2, c1, c2, rec0 = carry
        if isinstance(ch, int):                       # inline (static) path
            base = ch * U * TB
        else:                                         # fori_loop (dynamic) path
            base = pl.multiple_of(ch * (U * TB), 8)
        # Layer-0 input projection for U timesteps: one matmul per chunk, off
        # the serial per-step chain, VMEM bounded to (U*TB, 128) f32.
        x_chunk = x_ref[pl.ds(base, U * TB), :]                       # (U*TB, 8)
        xg = jnp.dot(x_chunk, wih0, preferred_element_type=f32) + b0  # (U*TB, 128)

        for u in range(U):
            xg_t = xg[u * TB:(u + 1) * TB, :]
            # Independent of this step's layer-0 update -> overlaps with it.
            t2 = jnp.dot(h2, whh1, preferred_element_type=f32)        # (TB, 128)
            # ---- layer 0 ----
            g0 = xg_t + rec0
            h1, c1 = cell(activate(g0), c1)
            # ---- fused recurrent matmul: [h1@whh0 | h1@wih1] in one issue ----
            t1 = jnp.dot(h1, wtop, preferred_element_type=f32)        # (TB, 256)
            rec0 = t1[:, :G]          # layer-0 recurrent gates for the next step
            # ---- layer 1 ----
            g1 = t1[:, G:] + t2 + b1
            h2, c2 = cell(activate(g1), c2)
        return h1, h2, c1, c2, rec0

    zeros = jnp.zeros((TB, H), f32)
    carry = (zeros, zeros, zeros, zeros, jnp.zeros((TB, G), f32))
    if n_chunks == 1:
        carry = chunk(0, carry)
    else:
        carry = lax.fori_loop(0, n_chunks, chunk, carry)
    h2 = carry[1]

    # LayerNorm over the feature dim (PyTorch: biased variance, eps=1e-5).
    mean = jnp.mean(h2, axis=-1, keepdims=True)
    var = jnp.mean((h2 - mean) ** 2, axis=-1, keepdims=True)
    y = (h2 - mean) * lax.rsqrt(var + LN_EPS)
    o_ref[...] = y * lnw_ref[...] + lnb_ref[...]


def _round_up(n, m):
    return ((n + m - 1) // m) * m


def _prep_kernel_params(p):
    """Pad / fuse weights into the kernel layout."""
    wih0p = jnp.zeros((D_PAD, 4 * D_MODEL), jnp.float32).at[:INPUT_DIM, :].set(
        p["wih0"])                                           # (8, 128)
    wtop = jnp.concatenate([p["whh0"], p["wih1"]], axis=1)   # (32, 256)
    return wih0p, p["b0"], wtop, p["whh1"], p["b1"], p["ln_w"], p["ln_b"]


def lstm_encoder(x, params, *, batch_tile=None):
    """x: (B, T, INPUT_DIM) float32 -> (B, D_MODEL) float32."""
    B, T, D = x.shape
    assert D == INPUT_DIM
    H = D_MODEL

    if batch_tile is None:
        # Cap at 64 rows to stay inside the 64-vreg file at f32.  On v7x with a
        # large batch, pass batch_tile=round_up(B/2, 8) so each TensorCore gets
        # exactly one tile; single-TC v5e/v6e prefer one tile when it fits.
        TB = min(64, _round_up(B, 8))
    else:
        assert batch_tile % 8 == 0, "batch_tile must be a multiple of 8"
        TB = batch_tile
    B_pad = _round_up(B, TB)
    n_tiles = B_pad // TB

    # Zero-pad batch + feature dims, rearrange so each batch tile owns one
    # contiguous, time-major (T*TB, D_PAD) slab (no reshapes inside the kernel).
    xp = jnp.pad(x.astype(jnp.float32),
                 ((0, B_pad - B), (0, 0), (0, D_PAD - D)))   # (B_pad, T, D_PAD)
    xp = xp.reshape(n_tiles, TB, T, D_PAD).transpose(0, 2, 1, 3)
    xp = xp.reshape(n_tiles * T * TB, D_PAD)

    wih0p, b0, wtop, whh1, b1, ln_w, ln_b = _prep_kernel_params(params)
    const2d = lambda arr: pl.BlockSpec(arr.shape, lambda i: (0, 0))

    # The x block is lane-padded 8 -> 128 in VMEM; raise the scoped-VMEM limit
    # only when a long sequence actually needs it (keeps v7x's 64 MiB safe).
    # TODO(synk): for very long T, add a time grid axis with h/c carried in VMEM
    # scratch so the per-tile x block itself stays bounded.
    x_block_bytes = T * TB * 128 * 4
    vmem_limit = None
    if 2 * x_block_bytes > (16 << 20):
        vmem_limit = min(2 * x_block_bytes + (8 << 20), 60 << 20)

    out = pl.pallas_call(
        lstm_encoder_kernel,
        out_shape=jax.ShapeDtypeStruct((B_pad, H), jnp.float32),
        grid=(n_tiles,),
        in_specs=[
            pl.BlockSpec((T * TB, D_PAD), lambda i: (i, 0)),  # per-tile x slab
            const2d(wih0p),   # (8, 128)
            const2d(b0),      # (1, 128)
            const2d(wtop),    # (32, 256)
            const2d(whh1),    # (32, 128)
            const2d(b1),      # (1, 128)
            const2d(ln_w),    # (1, 32)
            const2d(ln_b),    # (1, 32)
        ],
        out_specs=pl.BlockSpec((TB, H), lambda i: (i, 0)),
        compiler_params=pltpu.CompilerParams(
            dimension_semantics=("parallel",),     # 2nd TC on v7x if n_tiles > 1
            vmem_limit_bytes=vmem_limit),
    )(xp, wih0p, b0, wtop, whh1, b1, ln_w, ln_b)

    return out[:B]


def init_params(key):
    """Deterministic PyTorch-style init: U(-1/sqrt(H), 1/sqrt(H))."""
    H = D_MODEL
    bound = 1.0 / (H ** 0.5)
    ks = jax.random.split(key, 8)
    u = lambda k, shape: jax.random.uniform(k, shape, jnp.float32, -bound, bound)
    # Layer 0: W_ih (4H, INPUT_DIM), W_hh (4H, H); pre-transposed to (in, 4H).
    wih0 = u(ks[0], (4 * H, INPUT_DIM)).T
    whh0 = u(ks[1], (4 * H, H)).T
    b0 = (u(ks[2], (4 * H,)) + u(ks[3], (4 * H,))).reshape(1, 4 * H)  # b_ih + b_hh
    # Layer 1: W_ih (4H, H), W_hh (4H, H).
    wih1 = u(ks[4], (4 * H, H)).T
    whh1 = u(ks[5], (4 * H, H)).T
    b1 = (u(ks[6], (4 * H,)) + u(ks[7], (4 * H,))).reshape(1, 4 * H)
    # LayerNorm affine (PyTorch default init: ones / zeros).
    ln_w = jnp.ones((1, H), jnp.float32)
    ln_b = jnp.zeros((1, H), jnp.float32)
    return dict(wih0=wih0, whh0=whh0, b0=b0,
                wih1=wih1, whh1=whh1, b1=b1,
                ln_w=ln_w, ln_b=ln_b)


def reference(x, p):
    """Pure-JAX reference mirroring torch.nn.LSTM (eval) + LayerNorm."""
    B, T, _ = x.shape
    H = D_MODEL

    def cell(x_t, h, c, wih, whh, b):
        g = x_t @ wih + h @ whh + b
        i = jax.nn.sigmoid(g[:, 0 * H:1 * H])
        f = jax.nn.sigmoid(g[:, 1 * H:2 * H])
        gg = jnp.tanh(g[:, 2 * H:3 * H])
        o = jax.nn.sigmoid(g[:, 3 * H:4 * H])
        c = f * c + i * gg
        return o * jnp.tanh(c), c

    h1 = c1 = h2 = c2 = jnp.zeros((B, H), jnp.float32)
    for t in range(T):
        h1, c1 = cell(x[:, t, :], h1, c1, p["wih0"], p["whh0"], p["b0"])
        h2, c2 = cell(h1, h2, c2, p["wih1"], p["whh1"], p["b1"])
    mean = jnp.mean(h2, axis=-1, keepdims=True)
    var = jnp.mean((h2 - mean) ** 2, axis=-1, keepdims=True)
    return (h2 - mean) * lax.rsqrt(var + LN_EPS) * p["ln_w"] + p["ln_b"]


if __name__ == "__main__":
    key = jax.random.PRNGKey(0)
    k_x, k_p = jax.random.split(key)
    B, T = 2, 8
    x = jax.random.normal(k_x, (B, T, INPUT_DIM), jnp.float32)
    params = init_params(k_p)

    out = jax.block_until_ready(lstm_encoder(x, params))
    ref = reference(x, params)
    assert out.shape == (B, D_MODEL)
    assert jnp.allclose(out, ref, rtol=2e-3, atol=2e-3), "mismatch vs reference"
    print("KERNEL_OK")
</pallas_src>

<mosaic_0001>
module attributes {stable_mosaic.version = 11 : i64} {
  func.func @lstm_encoder_kernel(%arg0: i32, %arg1: memref<64x8xf32, #tpu.memory_space<vmem>>, %arg2: memref<8x128xf32, #tpu.memory_space<vmem>>, %arg3: memref<1x128xf32, #tpu.memory_space<vmem>>, %arg4: memref<32x256xf32, #tpu.memory_space<vmem>>, %arg5: memref<32x128xf32, #tpu.memory_space<vmem>>, %arg6: memref<1x128xf32, #tpu.memory_space<vmem>>, %arg7: memref<1x32xf32, #tpu.memory_space<vmem>>, %arg8: memref<1x32xf32, #tpu.memory_space<vmem>>, %arg9: memref<8x32xf32, #tpu.memory_space<vmem>>) attributes {dimension_semantics = [#tpu.dimension_semantics<parallel>], iteration_bounds = array<i64: 1>, scalar_prefetch = 0 : i64, scratch_operands = 0 : i64, tpu.core_type = #tpu.core_type<tc>, window_params = [{transform_indices = @transform_0, window_bounds = array<i64: 64, 8>}, {pipeline_mode = #tpu.pipeline_mode<synchronous>, transform_indices = @transform_1, window_bounds = array<i64: 8, 128>}, {pipeline_mode = #tpu.pipeline_mode<synchronous>, transform_indices = @transform_2, window_bounds = array<i64: 1, 128>}, {pipeline_mode = #tpu.pipeline_mode<synchronous>, transform_indices = @transform_3, window_bounds = array<i64: 32, 256>}, {pipeline_mode = #tpu.pipeline_mode<synchronous>, transform_indices = @transform_4, window_bounds = array<i64: 32, 128>}, {pipeline_mode = #tpu.pipeline_mode<synchronous>, transform_indices = @transform_5, window_bounds = array<i64: 1, 128>}, {pipeline_mode = #tpu.pipeline_mode<synchronous>, transform_indices = @transform_6, window_bounds = array<i64: 1, 32>}, {pipeline_mode = #tpu.pipeline_mode<synchronous>, transform_indices = @transform_7, window_bounds = array<i64: 1, 32>}, {transform_indices = @transform_8, window_bounds = array<i64: 8, 32>}]} {
    %c0 = arith.constant 0 : index
    %c0_0 = arith.constant 0 : index
    %0 = vector.load %arg2[%c0, %c0_0] : memref<8x128xf32, #tpu.memory_space<vmem>>, vector<8x128xf32>
    %c0_1 = arith.constant 0 : index
    %c0_2 = arith.constant 0 : index
    %1 = vector.load %arg3[%c0_1, %c0_2] : memref<1x128xf32, #tpu.memory_space<vmem>>, vector<1x128xf32>
    %c0_3 = arith.constant 0 : index
    %c0_4 = arith.constant 0 : index
    %2 = vector.load %arg4[%c0_3, %c0_4] : memref<32x256xf32, #tpu.memory_space<vmem>>, vector<32x256xf32>
    %c0_5 = arith.constant 0 : index
    %c0_6 = arith.constant 0 : index
    %3 = vector.load %arg5[%c0_5, %c0_6] : memref<32x128xf32, #tpu.memory_space<vmem>>, vector<32x128xf32>
    %c0_7 = arith.constant 0 : index
    %c0_8 = arith.constant 0 : index
    %4 = vector.load %arg6[%c0_7, %c0_8] : memref<1x128xf32, #tpu.memory_space<vmem>>, vector<1x128xf32>
    %5 = tpu.iota {dimensions = array<i32: 1>} : vector<1x128xi32>
    %c64_i32 = arith.constant 64 : i32
    %6 = vector.broadcast %c64_i32 : i32 to vector<1x128xi32>
    %7 = arith.cmpi sge, %5, %6 : vector<1x128xi32>
    %c96_i32 = arith.constant 96 : i32
    %8 = vector.broadcast %c96_i32 : i32 to vector<1x128xi32>
    %9 = arith.cmpi slt, %5, %8 : vector<1x128xi32>
    %10 = arith.andi %7, %9 : vector<1x128xi1>
    %cst = arith.constant 1.000000e+00 : f32
    %cst_9 = arith.constant 5.000000e-01 : f32
    %11 = vector.broadcast %cst : f32 to vector<1x128xf32>
    %12 = vector.broadcast %cst_9 : f32 to vector<1x128xf32>
    %13 = arith.select %10, %11, %12 : vector<1x128xi1>, vector<1x128xf32>
    %cst_10 = arith.constant 0.000000e+00 : f32
    %cst_11 = arith.constant 5.000000e-01 : f32
    %14 = vector.broadcast %cst_10 : f32 to vector<1x128xf32>
    %15 = vector.broadcast %cst_11 : f32 to vector<1x128xf32>
    %16 = arith.select %10, %14, %15 : vector<1x128xi1>, vector<1x128xf32>
    %cst_12 = arith.constant 0.000000e+00 : f32
    %17 = vector.broadcast %cst_12 : f32 to vector<8x32xf32>
    %cst_13 = arith.constant 0.000000e+00 : f32
    %18 = vector.broadcast %cst_13 : f32 to vector<8x128xf32>
    %c0_14 = arith.constant 0 : index
    %c0_15 = arith.constant 0 : index
    %19 = vector.load %arg1[%c0_14, %c0_15] : memref<64x8xf32, #tpu.memory_space<vmem>>, vector<64x8xf32>
    %cst_16 = arith.constant dense<0.000000e+00> : vector<64x128xf32>
    %20 = tpu.matmul %19, %0, %cst_16 {dimension_numbers = #tpu.dot_dimension_numbers<[1], [0], [0], [1], [0, 0, 1, 1], [], []>} : vector<64x8xf32>, vector<8x128xf32>, vector<64x128xf32> -> vector<64x128xf32>
    %21 = vector.broadcast %1 : vector<1x128xf32> to vector<64x128xf32>
    %22 = arith.addf %20, %21 : vector<64x128xf32>
    %23 = vector.extract_strided_slice %22 {offsets = [0, 0], sizes = [8, 128], strides = [1, 1]} : vector<64x128xf32> to vector<8x128xf32>
    %cst_17 = arith.constant dense<0.000000e+00> : vector<8x128xf32>
    %24 = tpu.matmul %17, %3, %cst_17 {dimension_numbers = #tpu.dot_dimension_numbers<[1], [0], [0], [1], [0, 0, 1, 1], [], []>} : vector<8x32xf32>, vector<32x128xf32>, vector<8x128xf32> -> vector<8x128xf32>
    %25 = arith.addf %23, %18 : vector<8x128xf32>
    %26 = vector.broadcast %13 : vector<1x128xf32> to vector<8x128xf32>
    %27 = arith.mulf %25, %26 : vector<8x128xf32>
    %28 = math.tanh %27 : vector<8x128xf32>
    %29 = vector.broadcast %13 : vector<1x128xf32> to vector<8x128xf32>
    %30 = arith.mulf %28, %29 : vector<8x128xf32>
    %31 = vector.broadcast %16 : vector<1x128xf32> to vector<8x128xf32>
    %32 = arith.addf %30, %31 : vector<8x128xf32>
    %33 = vector.extract_strided_slice %32 {offsets = [0, 0], sizes = [8, 32], strides = [1, 1]} : vector<8x128xf32> to vector<8x32xf32>
    %34 = vector.extract_strided_slice %32 {offsets = [0, 32], sizes = [8, 32], strides = [1, 1]} : vector<8x128xf32> to vector<8x32xf32>
    %35 = vector.extract_strided_slice %32 {offsets = [0, 64], sizes = [8, 32], strides = [1, 1]} : vector<8x128xf32> to vector<8x32xf32>
    %36 = vector.extract_strided_slice %32 {offsets = [0, 96], sizes = [8, 32], strides = [1, 1]} : vector<8x128xf32> to vector<8x32xf32>
    %37 = arith.mulf %34, %17 : vector<8x32xf32>
    %38 = arith.mulf %33, %35 : vector<8x32xf32>
    %39 = arith.addf %37, %38 : vector<8x32xf32>
    %40 = math.tanh %39 : vector<8x32xf32>
    %41 = arith.mulf %36, %40 : vector<8x32xf32>
    %cst_18 = arith.constant dense<0.000000e+00> : vector<8x256xf32>
    %42 = tpu.matmul %41, %2, %cst_18 {dimension_numbers = #tpu.dot_dimension_numbers<[1], [0], [0], [1], [0, 0, 1, 1], [], []>} : vector<8x32xf32>, vector<32x256xf32>, vector<8x256xf32> -> vector<8x256xf32>
    %43 = vector.extract_strided_slice %42 {offsets = [0, 0], sizes = [8, 128], strides = [1, 1]} : vector<8x256xf32> to vector<8x128xf32>
    %44 = vector.extract_strided_slice %42 {offsets = [0, 128], sizes = [8, 128], strides = [1, 1]} : vector<8x256xf32> to vector<8x128xf32>
    %45 = arith.addf %44, %24 : vector<8x128xf32>
    %46 = vector.broadcast %4 : vector<1x128xf32> to vector<8x128xf32>
    %47 = arith.addf %45, %46 : vector<8x128xf32>
    %48 = vector.broadcast %13 : vector<1x128xf32> to vector<8x128xf32>
    %49 = arith.mulf %47, %48 : vector<8x128xf32>
    %50 = math.tanh %49 : vector<8x128xf32>
    %51 = vector.broadcast %13 : vector<1x128xf32> to vector<8x128xf32>
    %52 = arith.mulf %50, %51 : vector<8x128xf32>
    %53 = vector.broadcast %16 : vector<1x128xf32> to vector<8x128xf32>
    %54 = arith.addf %52, %53 : vector<8x128xf32>
    %55 = vector.extract_strided_slice %54 {offsets = [0, 0], sizes = [8, 32], strides = [1, 1]} : vector<8x128xf32> to vector<8x32xf32>
    %56 = vector.extract_strided_slice %54 {offsets = [0, 32], sizes = [8, 32], strides = [1, 1]} : vector<8x128xf32> to vector<8x32xf32>
    %57 = vector.extract_strided_slice %54 {offsets = [0, 64], sizes = [8, 32], strides = [1, 1]} : vector<8x128xf32> to vector<8x32xf32>
    %58 = vector.extract_strided_slice %54 {offsets = [0, 96], sizes = [8, 32], strides = [1, 1]} : vector<8x128xf32> to vector<8x32xf32>
    %59 = arith.mulf %56, %17 : vector<8x32xf32>
    %60 = arith.mulf %55, %57 : vector<8x32xf32>
    %61 = arith.addf %59, %60 : vector<8x32xf32>
    %62 = math.tanh %61 : vector<8x32xf32>
    %63 = arith.mulf %58, %62 : vector<8x32xf32>
    %64 = vector.extract_strided_slice %22 {offsets = [8, 0], sizes = [8, 128], strides = [1, 1]} : vector<64x128xf32> to vector<8x128xf32>
    %cst_19 = arith.constant dense<0.000000e+00> : vector<8x128xf32>
    %65 = tpu.matmul %63, %3, %cst_19 {dimension_numbers = #tpu.dot_dimension_numbers<[1], [0], [0], [1], [0, 0, 1, 1], [], []>} : vector<8x32xf32>, vector<32x128xf32>, vector<8x128xf32> -> vector<8x128xf32>
    %66 = arith.addf %64, %43 : vector<8x128xf32>
    %67 = vector.broadcast %13 : vector<1x128xf32> to vector<8x128xf32>
    %68 = arith.mulf %66, %67 : vector<8x128xf32>
    %69 = math.tanh %68 : vector<8x128xf32>
    %70 = vector.broadcast %13 : vector<1x128xf32> to vector<8x128xf32>
    %71 = arith.mulf %69, %70 : vector<8x128xf32>
    %72 = vector.broadcast %16 : vector<1x128xf32> to vector<8x128xf32>
    %73 = arith.addf %71, %72 : vector<8x128xf32>
    %74 = vector.extract_strided_slice %73 {offsets = [0, 0], sizes = [8, 32], strides = [1, 1]} : vector<8x128xf32> to vector<8x32xf32>
    %75 = vector.extract_strided_slice %73 {offsets = [0, 32], sizes = [8, 32], strides = [1, 1]} : vector<8x128xf32> to vector<8x32xf32>
    %76 = vector.extract_strided_slice %73 {offsets = [0, 64], sizes = [8, 32], strides = [1, 1]} : vector<8x128xf32> to vector<8x32xf32>
    %77 = vector.extract_strided_slice %73 {offsets = [0, 96], sizes = [8, 32], strides = [1, 1]} : vector<8x128xf32> to vector<8x32xf32>
    %78 = arith.mulf %75, %39 : vector<8x32xf32>
    %79 = arith.mulf %74, %76 : vector<8x32xf32>
    %80 = arith.addf %78, %79 : vector<8x32xf32>
    %81 = math.tanh %80 : vector<8x32xf32>
    %82 = arith.mulf %77, %81 : vector<8x32xf32>
    %cst_20 = arith.constant dense<0.000000e+00> : vector<8x256xf32>
    %83 = tpu.matmul %82, %2, %cst_20 {dimension_numbers = #tpu.dot_dimension_numbers<[1], [0], [0], [1], [0, 0, 1, 1], [], []>} : vector<8x32xf32>, vector<32x256xf32>, vector<8x256xf32> -> vector<8x256xf32>
    %84 = vector.extract_strided_slice %83 {offsets = [0, 0], sizes = [8, 128], strides = [1, 1]} : vector<8x256xf32> to vector<8x128xf32>
    %85 = vector.extract_strided_slice %83 {offsets = [0, 128], sizes = [8, 128], strides = [1, 1]} : vector<8x256xf32> to vector<8x128xf32>
    %86 = arith.addf %85, %65 : vector<8x128xf32>
    %87 = vector.broadcast %4 : vector<1x128xf32> to vector<8x128xf32>
    %88 = arith.addf %86, %87 : vector<8x128xf32>
    %89 = vector.broadcast %13 : vector<1x128xf32> to vector<8x128xf32>
    %90 = arith.mulf %88, %89 : vector<8x128xf32>
    %91 = math.tanh %90 : vector<8x128xf32>
    %92 = vector.broadcast %13 : vector<1x128xf32> to vector<8x128xf32>
    %93 = arith.mulf %91, %92 : vector<8x128xf32>
    %94 = vector.broadcast %16 : vector<1x128xf32> to vector<8x128xf32>
    %95 = arith.addf %93, %94 : vector<8x128xf32>
    %96 = vector.extract_strided_slice %95 {offsets = [0, 0], sizes = [8, 32], strides = [1, 1]} : vector<8x128xf32> to vector<8x32xf32>
    %97 = vector.extract_strided_slice %95 {offsets = [0, 32], sizes = [8, 32], strides = [1, 1]} : vector<8x128xf32> to vector<8x32xf32>
    %98 = vector.extract_strided_slice %95 {offsets = [0, 64], sizes = [8, 32], strides = [1, 1]} : vector<8x128xf32> to vector<8x32xf32>
    %99 = vector.extract_strided_slice %95 {offsets = [0, 96], sizes = [8, 32], strides = [1, 1]} : vector<8x128xf32> to vector<8x32xf32>
    %100 = arith.mulf %97, %61 : vector<8x32xf32>
    %101 = arith.mulf %96, %98 : vector<8x32xf32>
    %102 = arith.addf %100, %101 : vector<8x32xf32>
    %103 = math.tanh %102 : vector<8x32xf32>
    %104 = arith.mulf %99, %103 : vector<8x32xf32>
    %105 = vector.extract_strided_slice %22 {offsets = [16, 0], sizes = [8, 128], strides = [1, 1]} : vector<64x128xf32> to vector<8x128xf32>
    %cst_21 = arith.constant dense<0.000000e+00> : vector<8x128xf32>
    %106 = tpu.matmul %104, %3, %cst_21 {dimension_numbers = #tpu.dot_dimension_numbers<[1], [0], [0], [1], [0, 0, 1, 1], [], []>} : vector<8x32xf32>, vector<32x128xf32>, vector<8x128xf32> -> vector<8x128xf32>
    %107 = arith.addf %105, %84 : vector<8x128xf32>
    %108 = vector.broadcast %13 : vector<1x128xf32> to vector<8x128xf32>
    %109 = arith.mulf %107, %108 : vector<8x128xf32>
    %110 = math.tanh %109 : vector<8x128xf32>
    %111 = vector.broadcast %13 : vector<1x128xf32> to vector<8x128xf32>
    %112 = arith.mulf %110, %111 : vector<8x128xf32>
    %113 = vector.broadcast %16 : vector<1x128xf32> to vector<8x128xf32>
    %114 = arith.addf %112, %113 : vector<8x128xf32>
    %115 = vector.extract_strided_slice %114 {offsets = [0, 0], sizes = [8, 32], strides = [1, 1]} : vector<8x128xf32> to vector<8x32xf32>
    %116 = vector.extract_strided_slice %114 {offsets = [0, 32], sizes = [8, 32], strides = [1, 1]} : vector<8x128xf32> to vector<8x32xf32>
    %117 = vector.extract_strided_slice %114 {offsets = [0, 64], sizes = [8, 32], strides = [1, 1]} : vector<8x128xf32> to vector<8x32xf32>
    %118 = vector.extract_strided_slice %114 {offsets = [0, 96], sizes = [8, 32], strides = [1, 1]} : vector<8x128xf32> to vector<8x32xf32>
    %119 = arith.mulf %116, %80 : vector<8x32xf32>
    %120 = arith.mulf %115, %117 : vector<8x32xf32>
    %121 = arith.addf %119, %120 : vector<8x32xf32>
    %122 = math.tanh %121 : vector<8x32xf32>
    %123 = arith.mulf %118, %122 : vector<8x32xf32>
    %cst_22 = arith.constant dense<0.000000e+00> : vector<8x256xf32>
    %124 = tpu.matmul %123, %2, %cst_22 {dimension_numbers = #tpu.dot_dimension_numbers<[1], [0], [0], [1], [0, 0, 1, 1], [], []>} : vector<8x32xf32>, vector<32x256xf32>, vector<8x256xf32> -> vector<8x256xf32>
    %125 = vector.extract_strided_slice %124 {offsets = [0, 0], sizes = [8, 128], strides = [1, 1]} : vector<8x256xf32> to vector<8x128xf32>
    %126 = vector.extract_strided_slice %124 {offsets = [0, 128], sizes = [8, 128], strides = [1, 1]} : vector<8x256xf32> to vector<8x128xf32>
    %127 = arith.addf %126, %106 : vector<8x128xf32>
    %128 = vector.broadcast %4 : vector<1x128xf32> to vector<8x128xf32>
    %129 = arith.addf %127, %128 : vector<8x128xf32>
    %130 = vector.broadcast %13 : vector<1x128xf32> to vector<8x128xf32>
    %131 = arith.mulf %129, %130 : vector<8x128xf32>
    %132 = math.tanh %131 : vector<8x128xf32>
    %133 = vector.broadcast %13 : vector<1x128xf32> to vector<8x128xf32>
    %134 = arith.mulf %132, %133 : vector<8x128xf32>
    %135 = vector.broadcast %16 : vector<1x128xf32> to vector<8x128xf32>
    %136 = arith.addf %134, %135 : vector<8x128xf32>
    %137 = vector.extract_strided_slice %136 {offsets = [0, 0], sizes = [8, 32], strides = [1, 1]} : vector<8x128xf32> to vector<8x32xf32>
    %138 = vector.extract_strided_slice %136 {offsets = [0, 32], sizes = [8, 32], strides = [1, 1]} : vector<8x128xf32> to vector<8x32xf32>
    %139 = vector.extract_strided_slice %136 {offsets = [0, 64], sizes = [8, 32], strides = [1, 1]} : vector<8x128xf32> to vector<8x32xf32>
    %140 = vector.extract_strided_slice %136 {offsets = [0, 96], sizes = [8, 32], strides = [1, 1]} : vector<8x128xf32> to vector<8x32xf32>
    %141 = arith.mulf %138, %102 : vector<8x32xf32>
    %142 = arith.mulf %137, %139 : vector<8x32xf32>
    %143 = arith.addf %141, %142 : vector<8x32xf32>
    %144 = math.tanh %143 : vector<8x32xf32>
    %145 = arith.mulf %140, %144 : vector<8x32xf32>
    %146 = vector.extract_strided_slice %22 {offsets = [24, 0], sizes = [8, 128], strides = [1, 1]} : vector<64x128xf32> to vector<8x128xf32>
    %cst_23 = arith.constant dense<0.000000e+00> : vector<8x128xf32>
    %147 = tpu.matmul %145, %3, %cst_23 {dimension_numbers = #tpu.dot_dimension_numbers<[1], [0], [0], [1], [0, 0, 1, 1], [], []>} : vector<8x32xf32>, vector<32x128xf32>, vector<8x128xf32> -> vector<8x128xf32>
    %148 = arith.addf %146, %125 : vector<8x128xf32>
    %149 = vector.broadcast %13 : vector<1x128xf32> to vector<8x128xf32>
    %150 = arith.mulf %148, %149 : vector<8x128xf32>
    %151 = math.tanh %150 : vector<8x128xf32>
    %152 = vector.broadcast %13 : vector<1x128xf32> to vector<8x128xf32>
    %153 = arith.mulf %151, %152 : vector<8x128xf32>
    %154 = vector.broadcast %16 : vector<1x128xf32> to vector<8x128xf32>
    %155 = arith.addf %153, %154 : vector<8x128xf32>
    %156 = vector.extract_strided_slice %155 {offsets = [0, 0], sizes = [8, 32], strides = [1, 1]} : vector<8x128xf32> to vector<8x32xf32>
    %157 = vector.extract_strided_slice %155 {offsets = [0, 32], sizes = [8, 32], strides = [1, 1]} : vector<8x128xf32> to vector<8x32xf32>
    %158 = vector.extract_strided_slice %155 {offsets = [0, 64], sizes = [8, 32], strides = [1, 1]} : vector<8x128xf32> to vector<8x32xf32>
    %159 = vector.extract_strided_slice %155 {offsets = [0, 96], sizes = [8, 32], strides = [1, 1]} : vector<8x128xf32> to vector<8x32xf32>
    %160 = arith.mulf %157, %121 : vector<8x32xf32>
    %161 = arith.mulf %156, %158 : vector<8x32xf32>
    %162 = arith.addf %160, %161 : vector<8x32xf32>
    %163 = math.tanh %162 : vector<8x32xf32>
    %164 = arith.mulf %159, %163 : vector<8x32xf32>
    %cst_24 = arith.constant dense<0.000000e+00> : vector<8x256xf32>
    %165 = tpu.matmul %164, %2, %cst_24 {dimension_numbers = #tpu.dot_dimension_numbers<[1], [0], [0], [1], [0, 0, 1, 1], [], []>} : vector<8x32xf32>, vector<32x256xf32>, vector<8x256xf32> -> vector<8x256xf32>
    %166 = vector.extract_strided_slice %165 {offsets = [0, 0], sizes = [8, 128], strides = [1, 1]} : vector<8x256xf32> to vector<8x128xf32>
    %167 = vector.extract_strided_slice %165 {offsets = [0, 128], sizes = [8, 128], strides = [1, 1]} : vector<8x256xf32> to vector<8x128xf32>
    %168 = arith.addf %167, %147 : vector<8x128xf32>
    %169 = vector.broadcast %4 : vector<1x128xf32> to vector<8x128xf32>
    %170 = arith.addf %168, %169 : vector<8x128xf32>
    %171 = vector.broadcast %13 : vector<1x128xf32> to vector<8x128xf32>
    %172 = arith.mulf %170, %171 : vector<8x128xf32>
    %173 = math.tanh %172 : vector<8x128xf32>
    %174 = vector.broadcast %13 : vector<1x128xf32> to vector<8x128xf32>
    %175 = arith.mulf %173, %174 : vector<8x128xf32>
    %176 = vector.broadcast %16 : vector<1x128xf32> to vector<8x128xf32>
    %177 = arith.addf %175, %176 : vector<8x128xf32>
    %178 = vector.extract_strided_slice %177 {offsets = [0, 0], sizes = [8, 32], strides = [1, 1]} : vector<8x128xf32> to vector<8x32xf32>
    %179 = vector.extract_strided_slice %177 {offsets = [0, 32], sizes = [8, 32], strides = [1, 1]} : vector<8x128xf32> to vector<8x32xf32>
    %180 = vector.extract_strided_slice %177 {offsets = [0, 64], sizes = [8, 32], strides = [1, 1]} : vector<8x128xf32> to vector<8x32xf32>
    %181 = vector.extract_strided_slice %177 {offsets = [0, 96], sizes = [8, 32], strides = [1, 1]} : vector<8x128xf32> to vector<8x32xf32>
    %182 = arith.mulf %179, %143 : vector<8x32xf32>
    %183 = arith.mulf %178, %180 : vector<8x32xf32>
    %184 = arith.addf %182, %183 : vector<8x32xf32>
    %185 = math.tanh %184 : vector<8x32xf32>
    %186 = arith.mulf %181, %185 : vector<8x32xf32>
    %187 = vector.extract_strided_slice %22 {offsets = [32, 0], sizes = [8, 128], strides = [1, 1]} : vector<64x128xf32> to vector<8x128xf32>
    %cst_25 = arith.constant dense<0.000000e+00> : vector<8x128xf32>
    %188 = tpu.matmul %186, %3, %cst_25 {dimension_numbers = #tpu.dot_dimension_numbers<[1], [0], [0], [1], [0, 0, 1, 1], [], []>} : vector<8x32xf32>, vector<32x128xf32>, vector<8x128xf32> -> vector<8x128xf32>
    %189 = arith.addf %187, %166 : vector<8x128xf32>
    %190 = vector.broadcast %13 : vector<1x128xf32> to vector<8x128xf32>
    %191 = arith.mulf %189, %190 : vector<8x128xf32>
    %192 = math.tanh %191 : vector<8x128xf32>
    %193 = vector.broadcast %13 : vector<1x128xf32> to vector<8x128xf32>
    %194 = arith.mulf %192, %193 : vector<8x128xf32>
    %195 = vector.broadcast %16 : vector<1x128xf32> to vector<8x128xf32>
    %196 = arith.addf %194, %195 : vector<8x128xf32>
    %197 = vector.extract_strided_slice %196 {offsets = [0, 0], sizes = [8, 32], strides = [1, 1]} : vector<8x128xf32> to vector<8x32xf32>
    %198 = vector.extract_strided_slice %196 {offsets = [0, 32], sizes = [8, 32], strides = [1, 1]} : vector<8x128xf32> to vector<8x32xf32>
    %199 = vector.extract_strided_slice %196 {offsets = [0, 64], sizes = [8, 32], strides = [1, 1]} : vector<8x128xf32> to vector<8x32xf32>
    %200 = vector.extract_strided_slice %196 {offsets = [0, 96], sizes = [8, 32], strides = [1, 1]} : vector<8x128xf32> to vector<8x32xf32>
    %201 = arith.mulf %198, %162 : vector<8x32xf32>
    %202 = arith.mulf %197, %199 : vector<8x32xf32>
    %203 = arith.addf %201, %202 : vector<8x32xf32>
    %204 = math.tanh %203 : vector<8x32xf32>
    %205 = arith.mulf %200, %204 : vector<8x32xf32>
    %cst_26 = arith.constant dense<0.000000e+00> : vector<8x256xf32>
    %206 = tpu.matmul %205, %2, %cst_26 {dimension_numbers = #tpu.dot_dimension_numbers<[1], [0], [0], [1], [0, 0, 1, 1], [], []>} : vector<8x32xf32>, vector<32x256xf32>, vector<8x256xf32> -> vector<8x256xf32>
    %207 = vector.extract_strided_slice %206 {offsets = [0, 0], sizes = [8, 128], strides = [1, 1]} : vector<8x256xf32> to vector<8x128xf32>
    %208 = vector.extract_strided_slice %206 {offsets = [0, 128], sizes = [8, 128], strides = [1, 1]} : vector<8x256xf32> to vector<8x128xf32>
    %209 = arith.addf %208, %188 : vector<8x128xf32>
    %210 = vector.broadcast %4 : vector<1x128xf32> to vector<8x128xf32>
    %211 = arith.addf %209, %210 : vector<8x128xf32>
    %212 = vector.broadcast %13 : vector<1x128xf32> to vector<8x128xf32>
    %213 = arith.mulf %211, %212 : vector<8x128xf32>
    %214 = math.tanh %213 : vector<8x128xf32>
    %215 = vector.broadcast %13 : vector<1x128xf32> to vector<8x128xf32>
    %216 = arith.mulf %214, %215 : vector<8x128xf32>
    %217 = vector.broadcast %16 : vector<1x128xf32> to vector<8x128xf32>
    %218 = arith.addf %216, %217 : vector<8x128xf32>
    %219 = vector.extract_strided_slice %218 {offsets = [0, 0], sizes = [8, 32], strides = [1, 1]} : vector<8x128xf32> to vector<8x32xf32>
    %220 = vector.extract_strided_slice %218 {offsets = [0, 32], sizes = [8, 32], strides = [1, 1]} : vector<8x128xf32> to vector<8x32xf32>
    %221 = vector.extract_strided_slice %218 {offsets = [0, 64], sizes = [8, 32], strides = [1, 1]} : vector<8x128xf32> to vector<8x32xf32>
    %222 = vector.extract_strided_slice %218 {offsets = [0, 96], sizes = [8, 32], strides = [1, 1]} : vector<8x128xf32> to vector<8x32xf32>
    %223 = arith.mulf %220, %184 : vector<8x32xf32>
    %224 = arith.mulf %219, %221 : vector<8x32xf32>
    %225 = arith.addf %223, %224 : vector<8x32xf32>
    %226 = math.tanh %225 : vector<8x32xf32>
    %227 = arith.mulf %222, %226 : vector<8x32xf32>
    %228 = vector.extract_strided_slice %22 {offsets = [40, 0], sizes = [8, 128], strides = [1, 1]} : vector<64x128xf32> to vector<8x128xf32>
    %cst_27 = arith.constant dense<0.000000e+00> : vector<8x128xf32>
    %229 = tpu.matmul %227, %3, %cst_27 {dimension_numbers = #tpu.dot_dimension_numbers<[1], [0], [0], [1], [0, 0, 1, 1], [], []>} : vector<8x32xf32>, vector<32x128xf32>, vector<8x128xf32> -> vector<8x128xf32>
    %230 = arith.addf %228, %207 : vector<8x128xf32>
    %231 = vector.broadcast %13 : vector<1x128xf32> to vector<8x128xf32>
    %232 = arith.mulf %230, %231 : vector<8x128xf32>
    %233 = math.tanh %232 : vector<8x128xf32>
    %234 = vector.broadcast %13 : vector<1x128xf32> to vector<8x128xf32>
    %235 = arith.mulf %233, %234 : vector<8x128xf32>
    %236 = vector.broadcast %16 : vector<1x128xf32> to vector<8x128xf32>
    %237 = arith.addf %235, %236 : vector<8x128xf32>
    %238 = vector.extract_strided_slice %237 {offsets = [0, 0], sizes = [8, 32], strides = [1, 1]} : vector<8x128xf32> to vector<8x32xf32>
    %239 = vector.extract_strided_slice %237 {offsets = [0, 32], sizes = [8, 32], strides = [1, 1]} : vector<8x128xf32> to vector<8x32xf32>
    %240 = vector.extract_strided_slice %237 {offsets = [0, 64], sizes = [8, 32], strides = [1, 1]} : vector<8x128xf32> to vector<8x32xf32>
    %241 = vector.extract_strided_slice %237 {offsets = [0, 96], sizes = [8, 32], strides = [1, 1]} : vector<8x128xf32> to vector<8x32xf32>
    %242 = arith.mulf %239, %203 : vector<8x32xf32>
    %243 = arith.mulf %238, %240 : vector<8x32xf32>
    %244 = arith.addf %242, %243 : vector<8x32xf32>
    %245 = math.tanh %244 : vector<8x32xf32>
    %246 = arith.mulf %241, %245 : vector<8x32xf32>
    %cst_28 = arith.constant dense<0.000000e+00> : vector<8x256xf32>
    %247 = tpu.matmul %246, %2, %cst_28 {dimension_numbers = #tpu.dot_dimension_numbers<[1], [0], [0], [1], [0, 0, 1, 1], [], []>} : vector<8x32xf32>, vector<32x256xf32>, vector<8x256xf32> -> vector<8x256xf32>
    %248 = vector.extract_strided_slice %247 {offsets = [0, 0], sizes = [8, 128], strides = [1, 1]} : vector<8x256xf32> to vector<8x128xf32>
    %249 = vector.extract_strided_slice %247 {offsets = [0, 128], sizes = [8, 128], strides = [1, 1]} : vector<8x256xf32> to vector<8x128xf32>
    %250 = arith.addf %249, %229 : vector<8x128xf32>
    %251 = vector.broadcast %4 : vector<1x128xf32> to vector<8x128xf32>
    %252 = arith.addf %250, %251 : vector<8x128xf32>
    %253 = vector.broadcast %13 : vector<1x128xf32> to vector<8x128xf32>
    %254 = arith.mulf %252, %253 : vector<8x128xf32>
    %255 = math.tanh %254 : vector<8x128xf32>
    %256 = vector.broadcast %13 : vector<1x128xf32> to vector<8x128xf32>
    %257 = arith.mulf %255, %256 : vector<8x128xf32>
    %258 = vector.broadcast %16 : vector<1x128xf32> to vector<8x128xf32>
    %259 = arith.addf %257, %258 : vector<8x128xf32>
    %260 = vector.extract_strided_slice %259 {offsets = [0, 0], sizes = [8, 32], strides = [1, 1]} : vector<8x128xf32> to vector<8x32xf32>
    %261 = vector.extract_strided_slice %259 {offsets = [0, 32], sizes = [8, 32], strides = [1, 1]} : vector<8x128xf32> to vector<8x32xf32>
    %262 = vector.extract_strided_slice %259 {offsets = [0, 64], sizes = [8, 32], strides = [1, 1]} : vector<8x128xf32> to vector<8x32xf32>
    %263 = vector.extract_strided_slice %259 {offsets = [0, 96], sizes = [8, 32], strides = [1, 1]} : vector<8x128xf32> to vector<8x32xf32>
    %264 = arith.mulf %261, %225 : vector<8x32xf32>
    %265 = arith.mulf %260, %262 : vector<8x32xf32>
    %266 = arith.addf %264, %265 : vector<8x32xf32>
    %267 = math.tanh %266 : vector<8x32xf32>
    %268 = arith.mulf %263, %267 : vector<8x32xf32>
    %269 = vector.extract_strided_slice %22 {offsets = [48, 0], sizes = [8, 128], strides = [1, 1]} : vector<64x128xf32> to vector<8x128xf32>
    %cst_29 = arith.constant dense<0.000000e+00> : vector<8x128xf32>
    %270 = tpu.matmul %268, %3, %cst_29 {dimension_numbers = #tpu.dot_dimension_numbers<[1], [0], [0], [1], [0, 0, 1, 1], [], []>} : vector<8x32xf32>, vector<32x128xf32>, vector<8x128xf32> -> vector<8x128xf32>
    %271 = arith.addf %269, %248 : vector<8x128xf32>
    %272 = vector.broadcast %13 : vector<1x128xf32> to vector<8x128xf32>
    %273 = arith.mulf %271, %272 : vector<8x128xf32>
    %274 = math.tanh %273 : vector<8x128xf32>
    %275 = vector.broadcast %13 : vector<1x128xf32> to vector<8x128xf32>
    %276 = arith.mulf %274, %275 : vector<8x128xf32>
    %277 = vector.broadcast %16 : vector<1x128xf32> to vector<8x128xf32>
    %278 = arith.addf %276, %277 : vector<8x128xf32>
    %279 = vector.extract_strided_slice %278 {offsets = [0, 0], sizes = [8, 32], strides = [1, 1]} : vector<8x128xf32> to vector<8x32xf32>
    %280 = vector.extract_strided_slice %278 {offsets = [0, 32], sizes = [8, 32], strides = [1, 1]} : vector<8x128xf32> to vector<8x32xf32>
    %281 = vector.extract_strided_slice %278 {offsets = [0, 64], sizes = [8, 32], strides = [1, 1]} : vector<8x128xf32> to vector<8x32xf32>
    %282 = vector.extract_strided_slice %278 {offsets = [0, 96], sizes = [8, 32], strides = [1, 1]} : vector<8x128xf32> to vector<8x32xf32>
    %283 = arith.mulf %280, %244 : vector<8x32xf32>
    %284 = arith.mulf %279, %281 : vector<8x32xf32>
    %285 = arith.addf %283, %284 : vector<8x32xf32>
    %286 = math.tanh %285 : vector<8x32xf32>
    %287 = arith.mulf %282, %286 : vector<8x32xf32>
    %cst_30 = arith.constant dense<0.000000e+00> : vector<8x256xf32>
    %288 = tpu.matmul %287, %2, %cst_30 {dimension_numbers = #tpu.dot_dimension_numbers<[1], [0], [0], [1], [0, 0, 1, 1], [], []>} : vector<8x32xf32>, vector<32x256xf32>, vector<8x256xf32> -> vector<8x256xf32>
    %289 = vector.extract_strided_slice %288 {offsets = [0, 0], sizes = [8, 128], strides = [1, 1]} : vector<8x256xf32> to vector<8x128xf32>
    %290 = vector.extract_strided_slice %288 {offsets = [0, 128], sizes = [8, 128], strides = [1, 1]} : vector<8x256xf32> to vector<8x128xf32>
    %291 = arith.addf %290, %270 : vector<8x128xf32>
    %292 = vector.broadcast %4 : vector<1x128xf32> to vector<8x128xf32>
    %293 = arith.addf %291, %292 : vector<8x128xf32>
    %294 = vector.broadcast %13 : vector<1x128xf32> to vector<8x128xf32>
    %295 = arith.mulf %293, %294 : vector<8x128xf32>
    %296 = math.tanh %295 : vector<8x128xf32>
    %297 = vector.broadcast %13 : vector<1x128xf32> to vector<8x128xf32>
    %298 = arith.mulf %296, %297 : vector<8x128xf32>
    %299 = vector.broadcast %16 : vector<1x128xf32> to vector<8x128xf32>
    %300 = arith.addf %298, %299 : vector<8x128xf32>
    %301 = vector.extract_strided_slice %300 {offsets = [0, 0], sizes = [8, 32], strides = [1, 1]} : vector<8x128xf32> to vector<8x32xf32>
    %302 = vector.extract_strided_slice %300 {offsets = [0, 32], sizes = [8, 32], strides = [1, 1]} : vector<8x128xf32> to vector<8x32xf32>
    %303 = vector.extract_strided_slice %300 {offsets = [0, 64], sizes = [8, 32], strides = [1, 1]} : vector<8x128xf32> to vector<8x32xf32>
    %304 = vector.extract_strided_slice %300 {offsets = [0, 96], sizes = [8, 32], strides = [1, 1]} : vector<8x128xf32> to vector<8x32xf32>
    %305 = arith.mulf %302, %266 : vector<8x32xf32>
    %306 = arith.mulf %301, %303 : vector<8x32xf32>
    %307 = arith.addf %305, %306 : vector<8x32xf32>
    %308 = math.tanh %307 : vector<8x32xf32>
    %309 = arith.mulf %304, %308 : vector<8x32xf32>
    %310 = vector.extract_strided_slice %22 {offsets = [56, 0], sizes = [8, 128], strides = [1, 1]} : vector<64x128xf32> to vector<8x128xf32>
    %cst_31 = arith.constant dense<0.000000e+00> : vector<8x128xf32>
    %311 = tpu.matmul %309, %3, %cst_31 {dimension_numbers = #tpu.dot_dimension_numbers<[1], [0], [0], [1], [0, 0, 1, 1], [], []>} : vector<8x32xf32>, vector<32x128xf32>, vector<8x128xf32> -> vector<8x128xf32>
    %312 = arith.addf %310, %289 : vector<8x128xf32>
    %313 = vector.broadcast %13 : vector<1x128xf32> to vector<8x128xf32>
    %314 = arith.mulf %312, %313 : vector<8x128xf32>
    %315 = math.tanh %314 : vector<8x128xf32>
    %316 = vector.broadcast %13 : vector<1x128xf32> to vector<8x128xf32>
    %317 = arith.mulf %315, %316 : vector<8x128xf32>
    %318 = vector.broadcast %16 : vector<1x128xf32> to vector<8x128xf32>
    %319 = arith.addf %317, %318 : vector<8x128xf32>
    %320 = vector.extract_strided_slice %319 {offsets = [0, 0], sizes = [8, 32], strides = [1, 1]} : vector<8x128xf32> to vector<8x32xf32>
    %321 = vector.extract_strided_slice %319 {offsets = [0, 32], sizes = [8, 32], strides = [1, 1]} : vector<8x128xf32> to vector<8x32xf32>
    %322 = vector.extract_strided_slice %319 {offsets = [0, 64], sizes = [8, 32], strides = [1, 1]} : vector<8x128xf32> to vector<8x32xf32>
    %323 = vector.extract_strided_slice %319 {offsets = [0, 96], sizes = [8, 32], strides = [1, 1]} : vector<8x128xf32> to vector<8x32xf32>
    %324 = arith.mulf %321, %285 : vector<8x32xf32>
    %325 = arith.mulf %320, %322 : vector<8x32xf32>
    %326 = arith.addf %324, %325 : vector<8x32xf32>
    %327 = math.tanh %326 : vector<8x32xf32>
    %328 = arith.mulf %323, %327 : vector<8x32xf32>
    %cst_32 = arith.constant dense<0.000000e+00> : vector<8x256xf32>
    %329 = tpu.matmul %328, %2, %cst_32 {dimension_numbers = #tpu.dot_dimension_numbers<[1], [0], [0], [1], [0, 0, 1, 1], [], []>} : vector<8x32xf32>, vector<32x256xf32>, vector<8x256xf32> -> vector<8x256xf32>
    %330 = vector.extract_strided_slice %329 {offsets = [0, 128], sizes = [8, 128], strides = [1, 1]} : vector<8x256xf32> to vector<8x128xf32>
    %331 = arith.addf %330, %311 : vector<8x128xf32>
    %332 = vector.broadcast %4 : vector<1x128xf32> to vector<8x128xf32>
    %333 = arith.addf %331, %332 : vector<8x128xf32>
    %334 = vector.broadcast %13 : vector<1x128xf32> to vector<8x128xf32>
    %335 = arith.mulf %333, %334 : vector<8x128xf32>
    %336 = math.tanh %335 : vector<8x128xf32>
    %337 = vector.broadcast %13 : vector<1x128xf32> to vector<8x128xf32>
    %338 = arith.mulf %336, %337 : vector<8x128xf32>
    %339 = vector.broadcast %16 : vector<1x128xf32> to vector<8x128xf32>
    %340 = arith.addf %338, %339 : vector<8x128xf32>
    %341 = vector.extract_strided_slice %340 {offsets = [0, 0], sizes = [8, 32], strides = [1, 1]} : vector<8x128xf32> to vector<8x32xf32>
    %342 = vector.extract_strided_slice %340 {offsets = [0, 32], sizes = [8, 32], strides = [1, 1]} : vector<8x128xf32> to vector<8x32xf32>
    %343 = vector.extract_strided_slice %340 {offsets = [0, 64], sizes = [8, 32], strides = [1, 1]} : vector<8x128xf32> to vector<8x32xf32>
    %344 = vector.extract_strided_slice %340 {offsets = [0, 96], sizes = [8, 32], strides = [1, 1]} : vector<8x128xf32> to vector<8x32xf32>
    %345 = arith.mulf %342, %307 : vector<8x32xf32>
    %346 = arith.mulf %341, %343 : vector<8x32xf32>
    %347 = arith.addf %345, %346 : vector<8x32xf32>
    %348 = math.tanh %347 : vector<8x32xf32>
    %349 = arith.mulf %344, %348 : vector<8x32xf32>
    %cst_33 = arith.constant dense<0.000000e+00> : vector<8xf32>
    %350 = vector.multi_reduction <add>, %349, %cst_33 [1] : vector<8x32xf32> to vector<8xf32>
    %351 = vector.shape_cast %350 : vector<8xf32> to vector<8x1xf32>
    %cst_34 = arith.constant 3.200000e+01 : f32
    %352 = vector.broadcast %cst_34 : f32 to vector<8x1xf32>
    %353 = arith.divf %351, %352 : vector<8x1xf32>
    %354 = vector.broadcast %353 : vector<8x1xf32> to vector<8x32xf32>
    %355 = arith.subf %349, %354 : vector<8x32xf32>
    %356 = arith.mulf %355, %355 : vector<8x32xf32>
    %cst_35 = arith.constant dense<0.000000e+00> : vector<8xf32>
    %357 = vector.multi_reduction <add>, %356, %cst_35 [1] : vector<8x32xf32> to vector<8xf32>
    %358 = vector.shape_cast %357 : vector<8xf32> to vector<8x1xf32>
    %cst_36 = arith.constant 3.200000e+01 : f32
    %359 = vector.broadcast %cst_36 : f32 to vector<8x1xf32>
    %360 = arith.divf %358, %359 : vector<8x1xf32>
    %361 = vector.broadcast %353 : vector<8x1xf32> to vector<8x32xf32>
    %362 = arith.subf %349, %361 : vector<8x32xf32>
    %cst_37 = arith.constant 9.99999974E-6 : f32
    %363 = vector.broadcast %cst_37 : f32 to vector<8x1xf32>
    %364 = arith.addf %360, %363 : vector<8x1xf32>
    %365 = math.rsqrt %364 : vector<8x1xf32>
    %366 = vector.broadcast %365 : vector<8x1xf32> to vector<8x32xf32>
    %367 = arith.mulf %362, %366 : vector<8x32xf32>
    %c0_38 = arith.constant 0 : index
    %c0_39 = arith.constant 0 : index
    %368 = vector.load %arg7[%c0_38, %c0_39] : memref<1x32xf32, #tpu.memory_space<vmem>>, vector<1x32xf32>
    %369 = vector.broadcast %368 : vector<1x32xf32> to vector<8x32xf32>
    %370 = arith.mulf %367, %369 : vector<8x32xf32>
    %c0_40 = arith.constant 0 : index
    %c0_41 = arith.constant 0 : index
    %371 = vector.load %arg8[%c0_40, %c0_41] : memref<1x32xf32, #tpu.memory_space<vmem>>, vector<1x32xf32>
    %372 = vector.broadcast %371 : vector<1x32xf32> to vector<8x32xf32>
    %373 = arith.addf %370, %372 : vector<8x32xf32>
    %c0_42 = arith.constant 0 : index
    %c0_43 = arith.constant 0 : index
    %374 = vector.load %arg9[%c0_42, %c0_43] : memref<8x32xf32, #tpu.memory_space<vmem>>, vector<8x32xf32>
    tpu.vector_store %arg9[%c0_42, %c0_43], %373 {strides = array<i32>} : memref<8x32xf32, #tpu.memory_space<vmem>>, vector<8x32xf32>,
    return
  }
  func.func @transform_0(%arg0: i32) -> (i32, i32) {
    %c0_i32 = arith.constant 0 : i32
    %c0_i32_0 = arith.constant 0 : i32
    return %arg0, %c0_i32 : i32, i32
  }
  func.func @transform_1(%arg0: i32) -> (i32, i32) {
    %c0_i32 = arith.constant 0 : i32
    %c0_i32_0 = arith.constant 0 : i32
    %c0_i32_1 = arith.constant 0 : i32
    return %c0_i32, %c0_i32_0 : i32, i32
  }
  func.func @transform_2(%arg0: i32) -> (i32, i32) {
    %c0_i32 = arith.constant 0 : i32
    %c0_i32_0 = arith.constant 0 : i32
    %c0_i32_1 = arith.constant 0 : i32
    return %c0_i32, %c0_i32_0 : i32, i32
  }
  func.func @transform_3(%arg0: i32) -> (i32, i32) {
    %c0_i32 = arith.constant 0 : i32
    %c0_i32_0 = arith.constant 0 : i32
    %c0_i32_1 = arith.constant 0 : i32
    return %c0_i32, %c0_i32_0 : i32, i32
  }
  func.func @transform_4(%arg0: i32) -> (i32, i32) {
    %c0_i32 = arith.constant 0 : i32
    %c0_i32_0 = arith.constant 0 : i32
    %c0_i32_1 = arith.constant 0 : i32
    return %c0_i32, %c0_i32_0 : i32, i32
  }
  func.func @transform_5(%arg0: i32) -> (i32, i32) {
    %c0_i32 = arith.constant 0 : i32
    %c0_i32_0 = arith.constant 0 : i32
    %c0_i32_1 = arith.constant 0 : i32
    return %c0_i32, %c0_i32_0 : i32, i32
  }
  func.func @transform_6(%arg0: i32) -> (i32, i32) {
    %c0_i32 = arith.constant 0 : i32
    %c0_i32_0 = arith.constant 0 : i32
    %c0_i32_1 = arith.constant 0 : i32
    return %c0_i32, %c0_i32_0 : i32, i32
  }
  func.func @transform_7(%arg0: i32) -> (i32, i32) {
    %c0_i32 = arith.constant 0 : i32
    %c0_i32_0 = arith.constant 0 : i32
    %c0_i32_1 = arith.constant 0 : i32
    return %c0_i32, %c0_i32_0 : i32, i32
  }
  func.func @transform_8(%arg0: i32) -> (i32, i32) {
    %c0_i32 = arith.constant 0 : i32
    %c0_i32_0 = arith.constant 0 : i32
    return %arg0, %c0_i32 : i32, i32
  }
}

</mosaic_0001>

<llo_original>
// kernel: tpu_custom_call.1
$region0: #{tpu_custom_call.1}
  #allocation0 [shape = 'u32[]', space=smem, size = 0x4, offset = 0x4, fixed_abs, tag = 'smem constant byte address 0x4 - core index']
  #allocation1 [shape = 'u32[144,128]{1,0:T(1,128)}', space=vmem, size = 0x12000, scoped, tag = 'internal scratch']
  %s0 = inlined_call_operand.vmem [shape: f32[64,8], index: 0, kind: input, shape index: {}]
  %s1 = inlined_call_operand.vmem [shape: f32[8,128], index: 1, kind: input, shape index: {}]
  %s2 = inlined_call_operand.vmem [shape: f32[1,128], index: 2, kind: input, shape index: {}]
  %s3 = inlined_call_operand.vmem [shape: f32[32,256], index: 3, kind: input, shape index: {}]
  %s4 = inlined_call_operand.hbm [shape: f32[32,128], index: 4, kind: input, shape index: {}]
  %s5 = inlined_call_operand.vmem [shape: f32[1,128], index: 5, kind: input, shape index: {}]
  %s6 = inlined_call_operand.vmem [shape: f32[1,32], index: 6, kind: input, shape index: {}]
  %s7 = inlined_call_operand.vmem [shape: f32[1,32], index: 7, kind: input, shape index: {}]
  %s8 = inlined_call_operand.hbm [shape: f32[8,32], index: 8, kind: output, shape index: {}]
  %s9 = sld [smem:[#allocation0]]
  $region46: #{tpu_custom_call.1} parent=0
    _
  %s11 = ssub.s32 1, %s9
  %s12 = scalar_select 0, %s11, %s9
  $region1: #{tpu_custom_call.1} parent=0
    #allocation2 [shape = 'u8[16384]{0}', space=vmem, size = 0x4000, scoped, tag = 'input window, operand 4, single buffered']
    #allocation3 [shape = 's32[1]{0}', space=sflag, size = 0x4, scoped, tag = 'scoped memory for tpu_custom_call.1']
    #allocation4 [shape = 's32[1]{0}', space=sflag, size = 0x4, scoped, tag = 'scoped memory for tpu_custom_call.1']
    #allocation5 [shape = 'u8[4096]{0}', space=vmem, size = 0x1000, scoped, tag = 'output window, operand 0, single buffered']
    %13 = vsyncpa [#allocation3], 0
    %14 = vsyncpa [#allocation4], 0
    // Predicated region
    $region2: #{tpu_custom_call.1} parent=1 // pred_check
      _
    $region3: #{tpu_custom_call.1} parent=1 // pred_check_branch
      %16 = sbr.rel (0) target = $region5
    $region4: #{tpu_custom_call.1} parent=1 // pred_region
      _
    $region5: #{tpu_custom_call.1} parent=1 // pred_fallthru
      _
    // Predicated region
    $region6: #{tpu_custom_call.1} parent=1 // pred_check
      _
    $region7: #{tpu_custom_call.1} parent=1 // pred_check_branch
      %18 = sbr.rel (0) target = $region9
    $region8: #{tpu_custom_call.1} parent=1 // pred_region
      _
    $region9: #{tpu_custom_call.1} parent=1 // pred_fallthru
      _
    // Predicated region
    $region10: #{tpu_custom_call.1} parent=1 // pred_check
      _
    $region11: #{tpu_custom_call.1} parent=1 // pred_check_branch
      %20 = sbr.rel (0) target = $region13
    $region12: #{tpu_custom_call.1} parent=1 // pred_region
      _
    $region13: #{tpu_custom_call.1} parent=1 // pred_fallthru
      _
    // Predicated region
    $region14: #{tpu_custom_call.1} parent=1 // pred_check
      _
    $region15: #{tpu_custom_call.1} parent=1 // pred_check_branch
      %22 = sbr.rel (0) target = $region17
    $region16: #{tpu_custom_call.1} parent=1 // pred_region
      _
    $region17: #{tpu_custom_call.1} parent=1 // pred_fallthru
      _
    // Predicated region
    $region18: #{tpu_custom_call.1} parent=1 // pred_check
      _
    $region19: #{tpu_custom_call.1} parent=1 // pred_check_branch
      %24 = sbr.rel (0) target = $region21
    $region20: #{tpu_custom_call.1} parent=1 // pred_region
      %s26 = ssub.s32 512, 512
      %27 = vsyncadd [#allocation3], %s26
      %s28 = sshll.u32 [#allocation2], 4
      %s29 = int_to_ptr.vmem [resolvable:$true] %s28
      %34 = dma.hbm_to_vmem [thread:$0]  %s4, 512, %s29, [#allocation3], 128, 128, 8
    $region21: #{tpu_custom_call.1} parent=1 // pred_fallthru
      _
    // Predicated region
    $region22: #{tpu_custom_call.1} parent=1 // pred_check
      _
    $region23: #{tpu_custom_call.1} parent=1 // pred_check_branch
      %36 = sbr.rel (0) target = $region25
    $region24: #{tpu_custom_call.1} parent=1 // pred_region
      _
    $region25: #{tpu_custom_call.1} parent=1 // pred_fallthru
      _
    // Predicated region
    $region26: #{tpu_custom_call.1} parent=1 // pred_check
      _
    $region27: #{tpu_custom_call.1} parent=1 // pred_check_branch
      %38 = sbr.rel (0) target = $region29
    $region28: #{tpu_custom_call.1} parent=1 // pred_region
      _
    $region29: #{tpu_custom_call.1} parent=1 // pred_fallthru
      _
    // Predicated region
    $region30: #{tpu_custom_call.1} parent=1 // pred_check
      _
    $region31: #{tpu_custom_call.1} parent=1 // pred_check_branch
      %40 = sbr.rel (0) target = $region33
    $region32: #{tpu_custom_call.1} parent=1 // pred_region
      _
    $region33: #{tpu_custom_call.1} parent=1 // pred_fallthru
      _
    // Predicated region
    $region34: #{tpu_custom_call.1} parent=1 // pred_check
      _
    $region35: #{tpu_custom_call.1} parent=1 // pred_check_branch
      %42 = sbr.rel (0) target = $region37
    $region36: #{tpu_custom_call.1} parent=1 // pred_region
      %43 = dma.done [#allocation3], 512
    $region37: #{tpu_custom_call.1} parent=1 // pred_fallthru
      _
    %v44 = vld [vmem:[%s1] sm:$0xff]
    %v45 = vld [vmem:[%s2] sm:$0x1]
    %v46 = vld [vmem:[%s3] sm:$0xff]
    %v47 = vld [vmem:[%s3 + $0x8] sm:$0xff]
    %v48 = vld [vmem:[%s3 + $0x10] sm:$0xff]
    %v49 = vld [vmem:[%s3 + $0x18] sm:$0xff]
    %v50 = vld [vmem:[%s3 + $0x20] sm:$0xff]
    %v51 = vld [vmem:[%s3 + $0x28] sm:$0xff]
    %v52 = vld [vmem:[%s3 + $0x30] sm:$0xff]
    %v53 = vld [vmem:[%s3 + $0x38] sm:$0xff]
    %v54 = vld [vmem:[#allocation2] sm:$0xff]
    %v55 = vld [vmem:[#allocation2 + $0x8] sm:$0xff]
    %v56 = vld [vmem:[#allocation2 + $0x10] sm:$0xff]
    %v57 = vld [vmem:[#allocation2 + $0x18] sm:$0xff]
    %v58 = vld [vmem:[%s5] sm:$0x1]
    %v59 = vlaneseq
    %v60 = vand.u32 %v59, 127
    %vm61 = vcmp.ge.s32.totalorder %v60, 64
    %vm62 = vcmp.lt.s32.totalorder %v60, 96
    %vm63 = vmand %vm61, %vm62
    %v64 = vsel %vm63, 1.0, 0.5
    %v65 = vsel %vm63, 0.0, 0.5
    %v66 = vld [vmem:[%s0] sm:$0xff]
    %v67 = vld [vmem:[%s0 + $0x8] sm:$0xff]
    %v68 = vld [vmem:[%s0 + $0x10] sm:$0xff]
    %v69 = vld [vmem:[%s0 + $0x18] sm:$0xff]
    %v70 = vld [vmem:[%s0 + $0x20] sm:$0xff]
    %v71 = vld [vmem:[%s0 + $0x28] sm:$0xff]
    %v72 = vld [vmem:[%s0 + $0x30] sm:$0xff]
    %v73 = vld [vmem:[%s0 + $0x38] sm:$0xff]
    %v75 = vlaneseq
    %v76 = vshrl.u32 %v75, 7
    %v77 = vsub.s32 0, %v76
    %v78 = vrot.slane %v45, %v77
    %vm80 = vcmask 64512
    %v82 = vsel %vm80, %v66, 0
    %v85 = vsel %vm80, %v67, 0
    %v88 = vsel %vm80, %v68, 0
    %v91 = vsel %vm80, %v69, 0
    %v94 = vsel %vm80, %v70, 0
    %v97 = vsel %vm80, %v71, 0
    %v100 = vsel %vm80, %v72, 0
    %v103 = vsel %vm80, %v73, 0
    %105 = vmatprep.subr.mxu0 0.0
    %106 = vmatpush1.msra.mxu0 %v44
    %107 = vmatprep.subr.mxu0 0.0
    %108 = vmatpush1.msra.mxu0 0.0
    %109 = vmatprep.subr.mxu0 0.0
    %110 = vmatpush1.msra.mxu0 0.0
    %111 = vmatprep.subr.mxu0 0.0
    %112 = vmatpush1.msra.mxu0 0.0
    %113 = vmatprep.subr.mxu0 0.0
    %114 = vmatpush1.msra.mxu0 0.0
    %115 = vmatprep.subr.mxu0 0.0
    %116 = vmatpush1.msra.mxu0 0.0
    %117 = vmatprep.subr.mxu0 0.0
    %118 = vmatpush1.msra.mxu0 0.0
    %119 = vmatprep.subr.mxu0 0.0
    %120 = vmatpush1.msra.mxu0 0.0
    %121 = vmatprep.subr.mxu0 0.0
    %122 = vmatpush1.msra.mxu0 0.0
    %123 = vmatprep.subr.mxu0 0.0
    %124 = vmatpush1.msra.mxu0 0.0
    %125 = vmatprep.subr.mxu0 0.0
    %126 = vmatpush1.msra.mxu0 0.0
    %127 = vmatprep.subr.mxu0 0.0
    %128 = vmatpush1.msra.mxu0 0.0
    %129 = vmatprep.subr.mxu0 0.0
    %130 = vmatpush1.msra.mxu0 0.0
    %131 = vmatprep.subr.mxu0 0.0
    %132 = vmatpush1.msra.mxu0 0.0
    %133 = vmatprep.subr.mxu0 0.0
    %134 = vmatpush1.msra.mxu0 0.0
    %135 = vmatprep.subr.mxu0 0.0
    %136 = vmatpush1.msra.mxu0 0.0
    %137 = vmatprep.subr.mxu0 0.0
    %138 = vmatpush1.msra.mxu0 0.0
    %139 = vmatprep.subr.mxu0 0.0
    %140 = vmatpush1.msra.mxu0 0.0
    %141 = vmatprep.subr.mxu0 0.0
    %142 = vmatpush1.msra.mxu0 0.0
    %143 = vmatprep.subr.mxu0 0.0
    %144 = vmatpush1.msra.mxu0 0.0
    %145 = vmatprep.subr.mxu0 0.0
    %146 = vmatpush1.msra.mxu0 0.0
    %147 = vmatprep.subr.mxu0 0.0
    %148 = vmatpush1.msra.mxu0 0.0
    %149 = vmatprep.subr.mxu0 0.0
    %150 = vmatpush1.msra.mxu0 0.0
    %151 = vmatprep.subr.mxu0 0.0
    %152 = vmatpush1.msra.mxu0 0.0
    %153 = vmatprep.subr.mxu0 0.0
    %154 = vmatpush1.msra.mxu0 0.0
    %155 = vmatprep.subr.mxu0 0.0
    %156 = vmatpush1.msra.mxu0 0.0
    %157 = vmatprep.subr.mxu0 0.0
    %158 = vmatpush1.msra.mxu0 0.0
    %159 = vmatprep.subr.mxu0 0.0
    %160 = vmatpush1.msra.mxu0 0.0
    %161 = vmatprep.subr.mxu0 0.0
    %162 = vmatpush1.msra.mxu0 0.0
    %163 = vmatprep.subr.mxu0 0.0
    %164 = vmatpush1.msra.mxu0 0.0
    %165 = vmatprep.subr.mxu0 0.0
    %166 = vmatpush1.msra.mxu0 0.0
    %167 = vmatprep.subr.mxu0 0.0
    %168 = vmatpush1.msra.mxu0 0.0
    %169 = vmatprep.mubr.f32.mxu0 0.0
    %170 = vmatmul.mubr.f32.gmra.mrb[0].mxu0 %v82
    %v171 = vpop.f32.mrb[0].mxu0
    %v172 = vadd.f32 %v78, %v171
    %v173 = vpop.f32.mrb[0].mxu0
    %174 = vmatprep.mubr.f32.mxu0 0.0
    %175 = vmatmul.mubr.f32.gmra.mrb[0].mxu0 %v85
    %v176 = vpop.f32.mrb[0].mxu0
    %v177 = vadd.f32 %v78, %v176
    %v178 = vpop.f32.mrb[0].mxu0
    %179 = vmatprep.mubr.f32.mxu0 0.0
    %180 = vmatmul.mubr.f32.gmra.mrb[0].mxu0 %v88
    %v181 = vpop.f32.mrb[0].mxu0
    %v182 = vadd.f32 %v78, %v181
    %v183 = vpop.f32.mrb[0].mxu0
    %184 = vmatprep.mubr.f32.mxu0 0.0
    %185 = vmatmul.mubr.f32.gmra.mrb[0].mxu0 %v91
    %v186 = vpop.f32.mrb[0].mxu0
    %v187 = vadd.f32 %v78, %v186
    %v188 = vpop.f32.mrb[0].mxu0
    %189 = vmatprep.mubr.f32.mxu0 0.0
    %190 = vmatmul.mubr.f32.gmra.mrb[0].mxu0 %v94
    %v191 = vpop.f32.mrb[0].mxu0
    %v192 = vadd.f32 %v78, %v191
    %v193 = vpop.f32.mrb[0].mxu0
    %194 = vmatprep.mubr.f32.mxu0 0.0
    %195 = vmatmul.mubr.f32.gmra.mrb[0].mxu0 %v97
    %v196 = vpop.f32.mrb[0].mxu0
    %v197 = vadd.f32 %v78, %v196
    %v198 = vpop.f32.mrb[0].mxu0
    %199 = vmatprep.mubr.f32.mxu0 0.0
    %200 = vmatmul.mubr.f32.gmra.mrb[0].mxu0 %v100
    %v201 = vpop.f32.mrb[0].mxu0
    %v202 = vadd.f32 %v78, %v201
    %v203 = vpop.f32.mrb[0].mxu0
    %204 = vmatprep.mubr.f32.mxu0 0.0
    %205 = vmatmul.mubr.f32.gmra.mrb[0].mxu0 %v103
    %v206 = vpop.f32.mrb[0].mxu0
    %v207 = vadd.f32 %v78, %v206
    %v208 = vpop.f32.mrb[0].mxu0
    %209 = vdwg.mxu0
    %vm210 = vcmask 261120
    %v212 = vsel %vm210, 0.0, 0
    %214 = vmatprep.subr.mxu0 0.0
    %215 = vmatpush1.msra.mxu0 %v54
    %216 = vmatprep.subr.mxu0 0.0
    %217 = vmatpush1.msra.mxu0 %v55
    %218 = vmatprep.subr.mxu0 0.0
    %219 = vmatpush1.msra.mxu0 %v56
    %220 = vmatprep.subr.mxu0 0.0
    %221 = vmatpush1.msra.mxu0 %v57
    %222 = vmatprep.subr.mxu0 0.0
    %223 = vmatpush1.msra.mxu0 0.0
    %224 = vmatprep.subr.mxu0 0.0
    %225 = vmatpush1.msra.mxu0 0.0
    %226 = vmatprep.subr.mxu0 0.0
    %227 = vmatpush1.msra.mxu0 0.0
    %228 = vmatprep.subr.mxu0 0.0
    %229 = vmatpush1.msra.mxu0 0.0
    %230 = vmatprep.subr.mxu0 0.0
    %231 = vmatpush1.msra.mxu0 0.0
    %232 = vmatprep.subr.mxu0 0.0
    %233 = vmatpush1.msra.mxu0 0.0
    %234 = vmatprep.subr.mxu0 0.0
    %235 = vmatpush1.msra.mxu0 0.0
    %236 = vmatprep.subr.mxu0 0.0
    %237 = vmatpush1.msra.mxu0 0.0
    %238 = vmatprep.subr.mxu0 0.0
    %239 = vmatpush1.msra.mxu0 0.0
    %240 = vmatprep.subr.mxu0 0.0
    %241 = vmatpush1.msra.mxu0 0.0
    %242 = vmatprep.subr.mxu0 0.0
    %243 = vmatpush1.msra.mxu0 0.0
    %244 = vmatprep.subr.mxu0 0.0
    %245 = vmatpush1.msra.mxu0 0.0
    %246 = vmatprep.subr.mxu0 0.0
    %247 = vmatpush1.msra.mxu0 0.0
    %248 = vmatprep.subr.mxu0 0.0
    %249 = vmatpush1.msra.mxu0 0.0
    %250 = vmatprep.subr.mxu0 0.0
    %251 = vmatpush1.msra.mxu0 0.0
    %252 = vmatprep.subr.mxu0 0.0
    %253 = vmatpush1.msra.mxu0 0.0
    %254 = vmatprep.subr.mxu0 0.0
    %255 = vmatpush1.msra.mxu0 0.0
    %256 = vmatprep.subr.mxu0 0.0
    %257 = vmatpush1.msra.mxu0 0.0
    %258 = vmatprep.subr.mxu0 0.0
    %259 = vmatpush1.msra.mxu0 0.0
    %260 = vmatprep.subr.mxu0 0.0
    %261 = vmatpush1.msra.mxu0 0.0
    %262 = vmatprep.subr.mxu0 0.0
    %263 = vmatpush1.msra.mxu0 0.0
    %264 = vmatprep.subr.mxu0 0.0
    %265 = vmatpush1.msra.mxu0 0.0
    %266 = vmatprep.subr.mxu0 0.0
    %267 = vmatpush1.msra.mxu0 0.0
    %268 = vmatprep.subr.mxu0 0.0
    %269 = vmatpush1.msra.mxu0 0.0
    %270 = vmatprep.subr.mxu0 0.0
    %271 = vmatpush1.msra.mxu0 0.0
    %272 = vmatprep.subr.mxu0 0.0
    %273 = vmatpush1.msra.mxu0 0.0
    %274 = vmatprep.subr.mxu0 0.0
    %275 = vmatpush1.msra.mxu0 0.0
    %276 = vmatprep.subr.mxu0 0.0
    %277 = vmatpush1.msra.mxu0 0.0
    %278 = vmatprep.mubr.f32.mxu0 0.0
    %279 = vmatmul.mubr.f32.gmra.mrb[0].mxu0 %v212
    %v280 = vpop.f32.mrb[0].mxu0
    %v281 = vadd.f32 0.0, %v280
    %v282 = vpop.f32.mrb[0].mxu0
    %283 = vdwg.mxu0
    %v284 = vadd.f32 %v172, 0.0
    %v285 = vmul.f32 %v284, %v64
    %v286 = vtanh.pop %v285
    %v287 = vmul.f32 %v286, %v64
    %v288 = vadd.f32 %v287, %v65
    %v289 = vmul.f32 %v288, 0.0
    %291 = vrot.lane.b32.xlu0 %v288, 64
    %v292 = vpop.permute.xlu0 %291
    %v294 = vmul.f32 %v288, %v292
    %296 = vrot.lane.b32.xlu0 %v294, 32
    %v297 = vpop.permute.xlu0 %296
    %v299 = vadd.f32 %v289, %v297
    %v300 = vtanh.pop %v299
    %302 = vrot.lane.b32.xlu0 %v300, 64
    %v303 = vpop.permute.xlu0 %302
    %v305 = vmul.f32 %v288, %v303
    %307 = vrot.lane.b32.xlu0 %v305, 32
    %v308 = vpop.permute.xlu0 %307
    %v309 = vsel %vm210, %v308, 0
    %311 = vmatprep.subr.mxu0 %v47
    %312 = vmatpush1.msra.mxu0 %v46
    %313 = vmatprep.subr.mxu0 %v49
    %314 = vmatpush1.msra.mxu0 %v48
    %315 = vmatprep.subr.mxu0 %v51
    %316 = vmatpush1.msra.mxu0 %v50
    %317 = vmatprep.subr.mxu0 %v53
    %318 = vmatpush1.msra.mxu0 %v52
    %319 = vmatprep.subr.mxu0 0.0
    %320 = vmatpush1.msra.mxu0 0.0
    %321 = vmatprep.subr.mxu0 0.0
    %322 = vmatpush1.msra.mxu0 0.0
    %323 = vmatprep.subr.mxu0 0.0
    %324 = vmatpush1.msra.mxu0 0.0
    %325 = vmatprep.subr.mxu0 0.0
    %326 = vmatpush1.msra.mxu0 0.0
    %327 = vmatprep.subr.mxu0 0.0
    %328 = vmatpush1.msra.mxu0 0.0
    %329 = vmatprep.subr.mxu0 0.0
    %330 = vmatpush1.msra.mxu0 0.0
    %331 = vmatprep.subr.mxu0 0.0
    %332 = vmatpush1.msra.mxu0 0.0
    %333 = vmatprep.subr.mxu0 0.0
    %334 = vmatpush1.msra.mxu0 0.0
    %335 = vmatprep.subr.mxu0 0.0
    %336 = vmatpush1.msra.mxu0 0.0
    %337 = vmatprep.subr.mxu0 0.0
    %338 = vmatpush1.msra.mxu0 0.0
    %339 = vmatprep.subr.mxu0 0.0
    %340 = vmatpush1.msra.mxu0 0.0
    %341 = vmatprep.subr.mxu0 0.0
    %342 = vmatpush1.msra.mxu0 0.0
    %343 = vmatprep.subr.mxu0 0.0
    %344 = vmatpush1.msra.mxu0 0.0
    %345 = vmatprep.subr.mxu0 0.0
    %346 = vmatpush1.msra.mxu0 0.0
    %347 = vmatprep.subr.mxu0 0.0
    %348 = vmatpush1.msra.mxu0 0.0
    %349 = vmatprep.subr.mxu0 0.0
    %350 = vmatpush1.msra.mxu0 0.0
    %351 = vmatprep.subr.mxu0 0.0
    %352 = vmatpush1.msra.mxu0 0.0
    %353 = vmatprep.subr.mxu0 0.0
    %354 = vmatpush1.msra.mxu0 0.0
    %355 = vmatprep.subr.mxu0 0.0
    %356 = vmatpush1.msra.mxu0 0.0
    %357 = vmatprep.subr.mxu0 0.0
    %358 = vmatpush1.msra.mxu0 0.0
    %359 = vmatprep.subr.mxu0 0.0
    %360 = vmatpush1.msra.mxu0 0.0
    %361 = vmatprep.subr.mxu0 0.0
    %362 = vmatpush1.msra.mxu0 0.0
    %363 = vmatprep.subr.mxu0 0.0
    %364 = vmatpush1.msra.mxu0 0.0
    %365 = vmatprep.subr.mxu0 0.0
    %366 = vmatpush1.msra.mxu0 0.0
    %367 = vmatprep.subr.mxu0 0.0
    %368 = vmatpush1.msra.mxu0 0.0
    %369 = vmatprep.subr.mxu0 0.0
    %370 = vmatpush1.msra.mxu0 0.0
    %371 = vmatprep.subr.mxu0 0.0
    %372 = vmatpush1.msra.mxu0 0.0
    %373 = vmatprep.subr.mxu0 0.0
    %374 = vmatpush1.msra.mxu0 0.0
    %375 = vmatprep.mubr.f32.mxu0 0.0
    %376 = vmatmul.mubr.f32.gmra.mrb[0].mxu0 %v309
    %v377 = vpop.f32.mrb[0].mxu0
    %v378 = vadd.f32 0.0, %v377
    %v379 = vpop.f32.mrb[0].mxu0
    %v380 = vadd.f32 0.0, %v379
    %381 = vdwg.mxu0
    %v382 = vadd.f32 %v380, %v281
    %v384 = vlaneseq
    %v385 = vshrl.u32 %v384, 7
    %v386 = vsub.s32 0, %v385
    %v387 = vrot.slane %v58, %v386
    %v389 = vadd.f32 %v382, %v387
    %v390 = vmul.f32 %v389, %v64
    %v391 = vtanh.pop %v390
    %v392 = vmul.f32 %v391, %v64
    %v393 = vadd.f32 %v392, %v65
    %v394 = vmul.f32 %v393, 0.0
    %396 = vrot.lane.b32.xlu0 %v393, 64
    %v397 = vpop.permute.xlu0 %396
    %v399 = vmul.f32 %v393, %v397
    %401 = vrot.lane.b32.xlu0 %v399, 32
    %v402 = vpop.permute.xlu0 %401
    %v404 = vadd.f32 %v394, %v402
    %v405 = vtanh.pop %v404
    %407 = vrot.lane.b32.xlu0 %v405, 64
    %v408 = vpop.permute.xlu0 %407
    %v410 = vmul.f32 %v393, %v408
    %412 = vrot.lane.b32.xlu0 %v410, 32
    %v413 = vpop.permute.xlu0 %412
    %v414 = vsel %vm210, %v413, 0
    %416 = vmatprep.subr.mxu0 0.0
    %417 = vmatpush1.msra.mxu0 %v54
    %418 = vmatprep.subr.mxu0 0.0
    %419 = vmatpush1.msra.mxu0 %v55
    %420 = vmatprep.subr.mxu0 0.0
    %421 = vmatpush1.msra.mxu0 %v56
    %422 = vmatprep.subr.mxu0 0.0
    %423 = vmatpush1.msra.mxu0 %v57
    %424 = vmatprep.subr.mxu0 0.0
    %425 = vmatpush1.msra.mxu0 0.0
    %426 = vmatprep.subr.mxu0 0.0
    %427 = vmatpush1.msra.mxu0 0.0
    %428 = vmatprep.subr.mxu0 0.0
    %429 = vmatpush1.msra.mxu0 0.0
    %430 = vmatprep.subr.mxu0 0.0
    %431 = vmatpush1.msra.mxu0 0.0
    %432 = vmatprep.subr.mxu0 0.0
    %433 = vmatpush1.msra.mxu0 0.0
    %434 = vmatprep.subr.mxu0 0.0
    %435 = vmatpush1.msra.mxu0 0.0
    %436 = vmatprep.subr.mxu0 0.0
    %437 = vmatpush1.msra.mxu0 0.0
    %438 = vmatprep.subr.mxu0 0.0
    %439 = vmatpush1.msra.mxu0 0.0
    %440 = vmatprep.subr.mxu0 0.0
    %441 = vmatpush1.msra.mxu0 0.0
    %442 = vmatprep.subr.mxu0 0.0
    %443 = vmatpush1.msra.mxu0 0.0
    %444 = vmatprep.subr.mxu0 0.0
    %445 = vmatpush1.msra.mxu0 0.0
    %446 = vmatprep.subr.mxu0 0.0
    %447 = vmatpush1.msra.mxu0 0.0
    %448 = vmatprep.subr.mxu0 0.0
    %449 = vmatpush1.msra.mxu0 0.0
    %450 = vmatprep.subr.mxu0 0.0
    %451 = vmatpush1.msra.mxu0 0.0
    %452 = vmatprep.subr.mxu0 0.0
    %453 = vmatpush1.msra.mxu0 0.0
    %454 = vmatprep.subr.mxu0 0.0
    %455 = vmatpush1.msra.mxu0 0.0
    %456 = vmatprep.subr.mxu0 0.0
    %457 = vmatpush1.msra.mxu0 0.0
    %458 = vmatprep.subr.mxu0 0.0
    %459 = vmatpush1.msra.mxu0 0.0
    %460 = vmatprep.subr.mxu0 0.0
    %461 = vmatpush1.msra.mxu0 0.0
    %462 = vmatprep.subr.mxu0 0.0
    %463 = vmatpush1.msra.mxu0 0.0
    %464 = vmatprep.subr.mxu0 0.0
    %465 = vmatpush1.msra.mxu0 0.0
    %466 = vmatprep.subr.mxu0 0.0
    %467 = vmatpush1.msra.mxu0 0.0
    %468 = vmatprep.subr.mxu0 0.0
    %469 = vmatpush1.msra.mxu0 0.0
    %470 = vmatprep.subr.mxu0 0.0
    %471 = vmatpush1.msra.mxu0 0.0
    %472 = vmatprep.subr.mxu0 0.0
    %473 = vmatpush1.msra.mxu0 0.0
    %474 = vmatprep.subr.mxu0 0.0
    %475 = vmatpush1.msra.mxu0 0.0
    %476 = vmatprep.subr.mxu0 0.0
    %477 = vmatpush1.msra.mxu0 0.0
    %478 = vmatprep.subr.mxu0 0.0
    %479 = vmatpush1.msra.mxu0 0.0
    %480 = vmatprep.mubr.f32.mxu0 0.0
    %481 = vmatmul.mubr.f32.gmra.mrb[0].mxu0 %v414
    %v482 = vpop.f32.mrb[0].mxu0
    %v483 = vadd.f32 0.0, %v482
    %v484 = vpop.f32.mrb[0].mxu0
    %485 = vdwg.mxu0
    %v486 = vadd.f32 %v177, %v378
    %v487 = vmul.f32 %v486, %v64
    %v488 = vtanh.pop %v487
    %v489 = vmul.f32 %v488, %v64
    %v490 = vadd.f32 %v489, %v65
    %v491 = vmul.f32 %v490, %v299
    %493 = vrot.lane.b32.xlu0 %v490, 64
    %v494 = vpop.permute.xlu0 %493
    %v496 = vmul.f32 %v490, %v494
    %498 = vrot.lane.b32.xlu0 %v496, 32
    %v499 = vpop.permute.xlu0 %498
    %v501 = vadd.f32 %v491, %v499
    %v502 = vtanh.pop %v501
    %504 = vrot.lane.b32.xlu0 %v502, 64
    %v505 = vpop.permute.xlu0 %504
    %v507 = vmul.f32 %v490, %v505
    %509 = vrot.lane.b32.xlu0 %v507, 32
    %v510 = vpop.permute.xlu0 %509
    %v511 = vsel %vm210, %v510, 0
    %513 = vmatprep.subr.mxu0 %v47
    %514 = vmatpush1.msra.mxu0 %v46
    %515 = vmatprep.subr.mxu0 %v49
    %516 = vmatpush1.msra.mxu0 %v48
    %517 = vmatprep.subr.mxu0 %v51
    %518 = vmatpush1.msra.mxu0 %v50
    %519 = vmatprep.subr.mxu0 %v53
    %520 = vmatpush1.msra.mxu0 %v52
    %521 = vmatprep.subr.mxu0 0.0
    %522 = vmatpush1.msra.mxu0 0.0
    %523 = vmatprep.subr.mxu0 0.0
    %524 = vmatpush1.msra.mxu0 0.0
    %525 = vmatprep.subr.mxu0 0.0
    %526 = vmatpush1.msra.mxu0 0.0
    %527 = vmatprep.subr.mxu0 0.0
    %528 = vmatpush1.msra.mxu0 0.0
    %529 = vmatprep.subr.mxu0 0.0
    %530 = vmatpush1.msra.mxu0 0.0
    %531 = vmatprep.subr.mxu0 0.0
    %532 = vmatpush1.msra.mxu0 0.0
    %533 = vmatprep.subr.mxu0 0.0
    %534 = vmatpush1.msra.mxu0 0.0
    %535 = vmatprep.subr.mxu0 0.0
    %536 = vmatpush1.msra.mxu0 0.0
    %537 = vmatprep.subr.mxu0 0.0
    %538 = vmatpush1.msra.mxu0 0.0
    %539 = vmatprep.subr.mxu0 0.0
    %540 = vmatpush1.msra.mxu0 0.0
    %541 = vmatprep.subr.mxu0 0.0
    %542 = vmatpush1.msra.mxu0 0.0
    %543 = vmatprep.subr.mxu0 0.0
    %544 = vmatpush1.msra.mxu0 0.0
    %545 = vmatprep.subr.mxu0 0.0
    %546 = vmatpush1.msra.mxu0 0.0
    %547 = vmatprep.subr.mxu0 0.0
    %548 = vmatpush1.msra.mxu0 0.0
    %549 = vmatprep.subr.mxu0 0.0
    %550 = vmatpush1.msra.mxu0 0.0
    %551 = vmatprep.subr.mxu0 0.0
    %552 = vmatpush1.msra.mxu0 0.0
    %553 = vmatprep.subr.mxu0 0.0
    %554 = vmatpush1.msra.mxu0 0.0
    %555 = vmatprep.subr.mxu0 0.0
    %556 = vmatpush1.msra.mxu0 0.0
    %557 = vmatprep.subr.mxu0 0.0
    %558 = vmatpush1.msra.mxu0 0.0
    %559 = vmatprep.subr.mxu0 0.0
    %560 = vmatpush1.msra.mxu0 0.0
    %561 = vmatprep.subr.mxu0 0.0
    %562 = vmatpush1.msra.mxu0 0.0
    %563 = vmatprep.subr.mxu0 0.0
    %564 = vmatpush1.msra.mxu0 0.0
    %565 = vmatprep.subr.mxu0 0.0
    %566 = vmatpush1.msra.mxu0 0.0
    %567 = vmatprep.subr.mxu0 0.0
    %568 = vmatpush1.msra.mxu0 0.0
    %569 = vmatprep.subr.mxu0 0.0
    %570 = vmatpush1.msra.mxu0 0.0
    %571 = vmatprep.subr.mxu0 0.0
    %572 = vmatpush1.msra.mxu0 0.0
    %573 = vmatprep.subr.mxu0 0.0
    %574 = vmatpush1.msra.mxu0 0.0
    %575 = vmatprep.subr.mxu0 0.0
    %576 = vmatpush1.msra.mxu0 0.0
    %577 = vmatprep.mubr.f32.mxu0 0.0
    %578 = vmatmul.mubr.f32.gmra.mrb[0].mxu0 %v511
    %v579 = vpop.f32.mrb[0].mxu0
    %v580 = vadd.f32 0.0, %v579
    %v581 = vpop.f32.mrb[0].mxu0
    %v582 = vadd.f32 0.0, %v581
    %583 = vdwg.mxu0
    %v584 = vadd.f32 %v582, %v483
    %v585 = vadd.f32 %v584, %v387
    %v586 = vmul.f32 %v585, %v64
    %v587 = vtanh.pop %v586
    %v588 = vmul.f32 %v587, %v64
    %v589 = vadd.f32 %v588, %v65
    %v590 = vmul.f32 %v589, %v404
    %592 = vrot.lane.b32.xlu0 %v589, 64
    %v593 = vpop.permute.xlu0 %592
    %v595 = vmul.f32 %v589, %v593
    %597 = vrot.lane.b32.xlu0 %v595, 32
    %v598 = vpop.permute.xlu0 %597
    %v600 = vadd.f32 %v590, %v598
    %v601 = vtanh.pop %v600
    %603 = vrot.lane.b32.xlu0 %v601, 64
    %v604 = vpop.permute.xlu0 %603
    %v606 = vmul.f32 %v589, %v604
    %608 = vrot.lane.b32.xlu0 %v606, 32
    %v609 = vpop.permute.xlu0 %608
    %v610 = vsel %vm210, %v609, 0
    %612 = vmatprep.subr.mxu0 0.0
    %613 = vmatpush1.msra.mxu0 %v54
    %614 = vmatprep.subr.mxu0 0.0
    %615 = vmatpush1.msra.mxu0 %v55
    %616 = vmatprep.subr.mxu0 0.0
    %617 = vmatpush1.msra.mxu0 %v56
    %618 = vmatprep.subr.mxu0 0.0
    %619 = vmatpush1.msra.mxu0 %v57
    %620 = vmatprep.subr.mxu0 0.0
    %621 = vmatpush1.msra.mxu0 0.0
    %622 = vmatprep.subr.mxu0 0.0
    %623 = vmatpush1.msra.mxu0 0.0
    %624 = vmatprep.subr.mxu0 0.0
    %625 = vmatpush1.msra.mxu0 0.0
    %626 = vmatprep.subr.mxu0 0.0
    %627 = vmatpush1.msra.mxu0 0.0
    %628 = vmatprep.subr.mxu0 0.0
    %629 = vmatpush1.msra.mxu0 0.0
    %630 = vmatprep.subr.mxu0 0.0
    %631 = vmatpush1.msra.mxu0 0.0
    %632 = vmatprep.subr.mxu0 0.0
    %633 = vmatpush1.msra.mxu0 0.0
    %634 = vmatprep.subr.mxu0 0.0
    %635 = vmatpush1.msra.mxu0 0.0
    %636 = vmatprep.subr.mxu0 0.0
    %637 = vmatpush1.msra.mxu0 0.0
    %638 = vmatprep.subr.mxu0 0.0
    %639 = vmatpush1.msra.mxu0 0.0
    %640 = vmatprep.subr.mxu0 0.0
    %641 = vmatpush1.msra.mxu0 0.0
    %642 = vmatprep.subr.mxu0 0.0
    %643 = vmatpush1.msra.mxu0 0.0
    %644 = vmatprep.subr.mxu0 0.0
    %645 = vmatpush1.msra.mxu0 0.0
    %646 = vmatprep.subr.mxu0 0.0
    %647 = vmatpush1.msra.mxu0 0.0
    %648 = vmatprep.subr.mxu0 0.0
    %649 = vmatpush1.msra.mxu0 0.0
    %650 = vmatprep.subr.mxu0 0.0
    %651 = vmatpush1.msra.mxu0 0.0
    %652 = vmatprep.subr.mxu0 0.0
    %653 = vmatpush1.msra.mxu0 0.0
    %654 = vmatprep.subr.mxu0 0.0
    %655 = vmatpush1.msra.mxu0 0.0
    %656 = vmatprep.subr.mxu0 0.0
    %657 = vmatpush1.msra.mxu0 0.0
    %658 = vmatprep.subr.mxu0 0.0
    %659 = vmatpush1.msra.mxu0 0.0
    %660 = vmatprep.subr.mxu0 0.0
    %661 = vmatpush1.msra.mxu0 0.0
    %662 = vmatprep.subr.mxu0 0.0
    %663 = vmatpush1.msra.mxu0 0.0
    %664 = vmatprep.subr.mxu0 0.0
    %665 = vmatpush1.msra.mxu0 0.0
    %666 = vmatprep.subr.mxu0 0.0
    %667 = vmatpush1.msra.mxu0 0.0
    %668 = vmatprep.subr.mxu0 0.0
    %669 = vmatpush1.msra.mxu0 0.0
    %670 = vmatprep.subr.mxu0 0.0
    %671 = vmatpush1.msra.mxu0 0.0
    %672 = vmatprep.subr.mxu0 0.0
    %673 = vmatpush1.msra.mxu0 0.0
    %674 = vmatprep.subr.mxu0 0.0
    %675 = vmatpush1.msra.mxu0 0.0
    %676 = vmatprep.mubr.f32.mxu0 0.0
    %677 = vmatmul.mubr.f32.gmra.mrb[0].mxu0 %v610
    %v678 = vpop.f32.mrb[0].mxu0
    %v679 = vadd.f32 0.0, %v678
    %v680 = vpop.f32.mrb[0].mxu0
    %681 = vdwg.mxu0
    %v682 = vadd.f32 %v182, %v580
    %v683 = vmul.f32 %v682, %v64
    %v684 = vtanh.pop %v683
    %v685 = vmul.f32 %v684, %v64
    %v686 = vadd.f32 %v685, %v65
    %v687 = vmul.f32 %v686, %v501
    %689 = vrot.lane.b32.xlu0 %v686, 64
    %v690 = vpop.permute.xlu0 %689
    %v692 = vmul.f32 %v686, %v690
    %694 = vrot.lane.b32.xlu0 %v692, 32
    %v695 = vpop.permute.xlu0 %694
    %v697 = vadd.f32 %v687, %v695
    %v698 = vtanh.pop %v697
    %700 = vrot.lane.b32.xlu0 %v698, 64
    %v701 = vpop.permute.xlu0 %700
    %v703 = vmul.f32 %v686, %v701
    %705 = vrot.lane.b32.xlu0 %v703, 32
    %v706 = vpop.permute.xlu0 %705
    %v707 = vsel %vm210, %v706, 0
    %709 = vmatprep.subr.mxu0 %v47
    %710 = vmatpush1.msra.mxu0 %v46
    %711 = vmatprep.subr.mxu0 %v49
    %712 = vmatpush1.msra.mxu0 %v48
    %713 = vmatprep.subr.mxu0 %v51
    %714 = vmatpush1.msra.mxu0 %v50
    %715 = vmatprep.subr.mxu0 %v53
    %716 = vmatpush1.msra.mxu0 %v52
    %717 = vmatprep.subr.mxu0 0.0
    %718 = vmatpush1.msra.mxu0 0.0
    %719 = vmatprep.subr.mxu0 0.0
    %720 = vmatpush1.msra.mxu0 0.0
    %721 = vmatprep.subr.mxu0 0.0
    %722 = vmatpush1.msra.mxu0 0.0
    %723 = vmatprep.subr.mxu0 0.0
    %724 = vmatpush1.msra.mxu0 0.0
    %725 = vmatprep.subr.mxu0 0.0
    %726 = vmatpush1.msra.mxu0 0.0
    %727 = vmatprep.subr.mxu0 0.0
    %728 = vmatpush1.msra.mxu0 0.0
    %729 = vmatprep.subr.mxu0 0.0
    %730 = vmatpush1.msra.mxu0 0.0
    %731 = vmatprep.subr.mxu0 0.0
    %732 = vmatpush1.msra.mxu0 0.0
    %733 = vmatprep.subr.mxu0 0.0
    %734 = vmatpush1.msra.mxu0 0.0
    %735 = vmatprep.subr.mxu0 0.0
    %736 = vmatpush1.msra.mxu0 0.0
    %737 = vmatprep.subr.mxu0 0.0
    %738 = vmatpush1.msra.mxu0 0.0
    %739 = vmatprep.subr.mxu0 0.0
    %740 = vmatpush1.msra.mxu0 0.0
    %741 = vmatprep.subr.mxu0 0.0
    %742 = vmatpush1.msra.mxu0 0.0
    %743 = vmatprep.subr.mxu0 0.0
    %744 = vmatpush1.msra.mxu0 0.0
    %745 = vmatprep.subr.mxu0 0.0
    %746 = vmatpush1.msra.mxu0 0.0
    %747 = vmatprep.subr.mxu0 0.0
    %748 = vmatpush1.msra.mxu0 0.0
    %749 = vmatprep.subr.mxu0 0.0
    %750 = vmatpush1.msra.mxu0 0.0
    %751 = vmatprep.subr.mxu0 0.0
    %752 = vmatpush1.msra.mxu0 0.0
    %753 = vmatprep.subr.mxu0 0.0
    %754 = vmatpush1.msra.mxu0 0.0
    %755 = vmatprep.subr.mxu0 0.0
    %756 = vmatpush1.msra.mxu0 0.0
    %757 = vmatprep.subr.mxu0 0.0
    %758 = vmatpush1.msra.mxu0 0.0
    %759 = vmatprep.subr.mxu0 0.0
    %760 = vmatpush1.msra.mxu0 0.0
    %761 = vmatprep.subr.mxu0 0.0
    %762 = vmatpush1.msra.mxu0 0.0
    %763 = vmatprep.subr.mxu0 0.0
    %764 = vmatpush1.msra.mxu0 0.0
    %765 = vmatprep.subr.mxu0 0.0
    %766 = vmatpush1.msra.mxu0 0.0
    %767 = vmatprep.subr.mxu0 0.0
    %768 = vmatpush1.msra.mxu0 0.0
    %769 = vmatprep.subr.mxu0 0.0
    %770 = vmatpush1.msra.mxu0 0.0
    %771 = vmatprep.subr.mxu0 0.0
    %772 = vmatpush1.msra.mxu0 0.0
    %773 = vmatprep.mubr.f32.mxu0 0.0
    %774 = vmatmul.mubr.f32.gmra.mrb[0].mxu0 %v707
    %v775 = vpop.f32.mrb[0].mxu0
    %v776 = vadd.f32 0.0, %v775
    %v777 = vpop.f32.mrb[0].mxu0
    %v778 = vadd.f32 0.0, %v777
    %779 = vdwg.mxu0
    %v780 = vadd.f32 %v778, %v679
    %v781 = vadd.f32 %v780, %v387
    %v782 = vmul.f32 %v781, %v64
    %v783 = vtanh.pop %v782
    %v784 = vmul.f32 %v783, %v64
    %v785 = vadd.f32 %v784, %v65
    %v786 = vmul.f32 %v785, %v600
    %788 = vrot.lane.b32.xlu0 %v785, 64
    %v789 = vpop.permute.xlu0 %788
    %v791 = vmul.f32 %v785, %v789
    %793 = vrot.lane.b32.xlu0 %v791, 32
    %v794 = vpop.permute.xlu0 %793
    %v796 = vadd.f32 %v786, %v794
    %v797 = vtanh.pop %v796
    %799 = vrot.lane.b32.xlu0 %v797, 64
    %v800 = vpop.permute.xlu0 %799
    %v802 = vmul.f32 %v785, %v800
    %804 = vrot.lane.b32.xlu0 %v802, 32
    %v805 = vpop.permute.xlu0 %804
    %v806 = vsel %vm210, %v805, 0
    %808 = vmatprep.subr.mxu0 0.0
    %809 = vmatpush1.msra.mxu0 %v54
    %810 = vmatprep.subr.mxu0 0.0
    %811 = vmatpush1.msra.mxu0 %v55
    %812 = vmatprep.subr.mxu0 0.0
    %813 = vmatpush1.msra.mxu0 %v56
    %814 = vmatprep.subr.mxu0 0.0
    %815 = vmatpush1.msra.mxu0 %v57
    %816 = vmatprep.subr.mxu0 0.0
    %817 = vmatpush1.msra.mxu0 0.0
    %818 = vmatprep.subr.mxu0 0.0
    %819 = vmatpush1.msra.mxu0 0.0
    %820 = vmatprep.subr.mxu0 0.0
    %821 = vmatpush1.msra.mxu0 0.0
    %822 = vmatprep.subr.mxu0 0.0
    %823 = vmatpush1.msra.mxu0 0.0
    %824 = vmatprep.subr.mxu0 0.0
    %825 = vmatpush1.msra.mxu0 0.0
    %826 = vmatprep.subr.mxu0 0.0
    %827 = vmatpush1.msra.mxu0 0.0
    %828 = vmatprep.subr.mxu0 0.0
    %829 = vmatpush1.msra.mxu0 0.0
    %830 = vmatprep.subr.mxu0 0.0
    %831 = vmatpush1.msra.mxu0 0.0
    %832 = vmatprep.subr.mxu0 0.0
    %833 = vmatpush1.msra.mxu0 0.0
    %834 = vmatprep.subr.mxu0 0.0
    %835 = vmatpush1.msra.mxu0 0.0
    %836 = vmatprep.subr.mxu0 0.0
    %837 = vmatpush1.msra.mxu0 0.0
    %838 = vmatprep.subr.mxu0 0.0
    %839 = vmatpush1.msra.mxu0 0.0
    %840 = vmatprep.subr.mxu0 0.0
    %841 = vmatpush1.msra.mxu0 0.0
    %842 = vmatprep.subr.mxu0 0.0
    %843 = vmatpush1.msra.mxu0 0.0
    %844 = vmatprep.subr.mxu0 0.0
    %845 = vmatpush1.msra.mxu0 0.0
    %846 = vmatprep.subr.mxu0 0.0
    %847 = vmatpush1.msra.mxu0 0.0
    %848 = vmatprep.subr.mxu0 0.0
    %849 = vmatpush1.msra.mxu0 0.0
    %850 = vmatprep.subr.mxu0 0.0
    %851 = vmatpush1.msra.mxu0 0.0
    %852 = vmatprep.subr.mxu0 0.0
    %853 = vmatpush1.msra.mxu0 0.0
    %854 = vmatprep.subr.mxu0 0.0
    %855 = vmatpush1.msra.mxu0 0.0
    %856 = vmatprep.subr.mxu0 0.0
    %857 = vmatpush1.msra.mxu0 0.0
    %858 = vmatprep.subr.mxu0 0.0
    %859 = vmatpush1.msra.mxu0 0.0
    %860 = vmatprep.subr.mxu0 0.0
    %861 = vmatpush1.msra.mxu0 0.0
    %862 = vmatprep.subr.mxu0 0.0
    %863 = vmatpush1.msra.mxu0 0.0
    %864 = vmatprep.subr.mxu0 0.0
    %865 = vmatpush1.msra.mxu0 0.0
    %866 = vmatprep.subr.mxu0 0.0
    %867 = vmatpush1.msra.mxu0 0.0
    %868 = vmatprep.subr.mxu0 0.0
    %869 = vmatpush1.msra.mxu0 0.0
    %870 = vmatprep.subr.mxu0 0.0
    %871 = vmatpush1.msra.mxu0 0.0
    %872 = vmatprep.mubr.f32.mxu0 0.0
    %873 = vmatmul.mubr.f32.gmra.mrb[0].mxu0 %v806
    %v874 = vpop.f32.mrb[0].mxu0
    %v875 = vadd.f32 0.0, %v874
    %v876 = vpop.f32.mrb[0].mxu0
    %877 = vdwg.mxu0
    %v878 = vadd.f32 %v187, %v776
    %v879 = vmul.f32 %v878, %v64
    %v880 = vtanh.pop %v879
    %v881 = vmul.f32 %v880, %v64
    %v882 = vadd.f32 %v881, %v65
    %v883 = vmul.f32 %v882, %v697
    %885 = vrot.lane.b32.xlu0 %v882, 64
    %v886 = vpop.permute.xlu0 %885
    %v888 = vmul.f32 %v882, %v886
    %890 = vrot.lane.b32.xlu0 %v888, 32
    %v891 = vpop.permute.xlu0 %890
    %v893 = vadd.f32 %v883, %v891
    %v894 = vtanh.pop %v893
    %896 = vrot.lane.b32.xlu0 %v894, 64
    %v897 = vpop.permute.xlu0 %896
    %v899 = vmul.f32 %v882, %v897
    %901 = vrot.lane.b32.xlu0 %v899, 32
    %v902 = vpop.permute.xlu0 %901
    %v903 = vsel %vm210, %v902, 0
    %905 = vmatprep.subr.mxu0 %v47
    %906 = vmatpush1.msra.mxu0 %v46
    %907 = vmatprep.subr.mxu0 %v49
    %908 = vmatpush1.msra.mxu0 %v48
    %909 = vmatprep.subr.mxu0 %v51
    %910 = vmatpush1.msra.mxu0 %v50
    %911 = vmatprep.subr.mxu0 %v53
    %912 = vmatpush1.msra.mxu0 %v52
    %913 = vmatprep.subr.mxu0 0.0
    %914 = vmatpush1.msra.mxu0 0.0
    %915 = vmatprep.subr.mxu0 0.0
    %916 = vmatpush1.msra.mxu0 0.0
    %917 = vmatprep.subr.mxu0 0.0
    %918 = vmatpush1.msra.mxu0 0.0
    %919 = vmatprep.subr.mxu0 0.0
    %920 = vmatpush1.msra.mxu0 0.0
    %921 = vmatprep.subr.mxu0 0.0
    %922 = vmatpush1.msra.mxu0 0.0
    %923 = vmatprep.subr.mxu0 0.0
    %924 = vmatpush1.msra.mxu0 0.0
    %925 = vmatprep.subr.mxu0 0.0
    %926 = vmatpush1.msra.mxu0 0.0
    %927 = vmatprep.subr.mxu0 0.0
    %928 = vmatpush1.msra.mxu0 0.0
    %929 = vmatprep.subr.mxu0 0.0
    %930 = vmatpush1.msra.mxu0 0.0
    %931 = vmatprep.subr.mxu0 0.0
    %932 = vmatpush1.msra.mxu0 0.0
    %933 = vmatprep.subr.mxu0 0.0
    %934 = vmatpush1.msra.mxu0 0.0
    %935 = vmatprep.subr.mxu0 0.0
    %936 = vmatpush1.msra.mxu0 0.0
    %937 = vmatprep.subr.mxu0 0.0
    %938 = vmatpush1.msra.mxu0 0.0
    %939 = vmatprep.subr.mxu0 0.0
    %940 = vmatpush1.msra.mxu0 0.0
    %941 = vmatprep.subr.mxu0 0.0
    %942 = vmatpush1.msra.mxu0 0.0
    %943 = vmatprep.subr.mxu0 0.0
    %944 = vmatpush1.msra.mxu0 0.0
    %945 = vmatprep.subr.mxu0 0.0
    %946 = vmatpush1.msra.mxu0 0.0
    %947 = vmatprep.subr.mxu0 0.0
    %948 = vmatpush1.msra.mxu0 0.0
    %949 = vmatprep.subr.mxu0 0.0
    %950 = vmatpush1.msra.mxu0 0.0
    %951 = vmatprep.subr.mxu0 0.0
    %952 = vmatpush1.msra.mxu0 0.0
    %953 = vmatprep.subr.mxu0 0.0
    %954 = vmatpush1.msra.mxu0 0.0
    %955 = vmatprep.subr.mxu0 0.0
    %956 = vmatpush1.msra.mxu0 0.0
    %957 = vmatprep.subr.mxu0 0.0
    %958 = vmatpush1.msra.mxu0 0.0
    %959 = vmatprep.subr.mxu0 0.0
    %960 = vmatpush1.msra.mxu0 0.0
    %961 = vmatprep.subr.mxu0 0.0
    %962 = vmatpush1.msra.mxu0 0.0
    %963 = vmatprep.subr.mxu0 0.0
    %964 = vmatpush1.msra.mxu0 0.0
    %965 = vmatprep.subr.mxu0 0.0
    %966 = vmatpush1.msra.mxu0 0.0
    %967 = vmatprep.subr.mxu0 0.0
    %968 = vmatpush1.msra.mxu0 0.0
    %969 = vmatprep.mubr.f32.mxu0 0.0
    %970 = vmatmul.mubr.f32.gmra.mrb[0].mxu0 %v903
    %v971 = vpop.f32.mrb[0].mxu0
    %v972 = vadd.f32 0.0, %v971
    %v973 = vpop.f32.mrb[0].mxu0
    %v974 = vadd.f32 0.0, %v973
    %975 = vdwg.mxu0
    %v976 = vadd.f32 %v974, %v875
    %v977 = vadd.f32 %v976, %v387
    %v978 = vmul.f32 %v977, %v64
    %v979 = vtanh.pop %v978
    %v980 = vmul.f32 %v979, %v64
    %v981 = vadd.f32 %v980, %v65
    %v982 = vmul.f32 %v981, %v796
    %984 = vrot.lane.b32.xlu0 %v981, 64
    %v985 = vpop.permute.xlu0 %984
    %v987 = vmul.f32 %v981, %v985
    %989 = vrot.lane.b32.xlu0 %v987, 32
    %v990 = vpop.permute.xlu0 %989
    %v992 = vadd.f32 %v982, %v990
    %v993 = vtanh.pop %v992
    %995 = vrot.lane.b32.xlu0 %v993, 64
    %v996 = vpop.permute.xlu0 %995
    %v998 = vmul.f32 %v981, %v996
    %1000 = vrot.lane.b32.xlu0 %v998, 32
    %v1001 = vpop.permute.xlu0 %1000
    %v1002 = vsel %vm210, %v1001, 0
    %1004 = vmatprep.subr.mxu0 0.0
    %1005 = vmatpush1.msra.mxu0 %v54
    %1006 = vmatprep.subr.mxu0 0.0
    %1007 = vmatpush1.msra.mxu0 %v55
    %1008 = vmatprep.subr.mxu0 0.0
    %1009 = vmatpush1.msra.mxu0 %v56
    %1010 = vmatprep.subr.mxu0 0.0
    %1011 = vmatpush1.msra.mxu0 %v57
    %1012 = vmatprep.subr.mxu0 0.0
    %1013 = vmatpush1.msra.mxu0 0.0
    %1014 = vmatprep.subr.mxu0 0.0
    %1015 = vmatpush1.msra.mxu0 0.0
    %1016 = vmatprep.subr.mxu0 0.0
    %1017 = vmatpush1.msra.mxu0 0.0
    %1018 = vmatprep.subr.mxu0 0.0
    %1019 = vmatpush1.msra.mxu0 0.0
    %1020 = vmatprep.subr.mxu0 0.0
    %1021 = vmatpush1.msra.mxu0 0.0
    %1022 = vmatprep.subr.mxu0 0.0
    %1023 = vmatpush1.msra.mxu0 0.0
    %1024 = vmatprep.subr.mxu0 0.0
    %1025 = vmatpush1.msra.mxu0 0.0
    %1026 = vmatprep.subr.mxu0 0.0
    %1027 = vmatpush1.msra.mxu0 0.0
    %1028 = vmatprep.subr.mxu0 0.0
    %1029 = vmatpush1.msra.mxu0 0.0
    %1030 = vmatprep.subr.mxu0 0.0
    %1031 = vmatpush1.msra.mxu0 0.0
    %1032 = vmatprep.subr.mxu0 0.0
    %1033 = vmatpush1.msra.mxu0 0.0
    %1034 = vmatprep.subr.mxu0 0.0
    %1035 = vmatpush1.msra.mxu0 0.0
    %1036 = vmatprep.subr.mxu0 0.0
    %1037 = vmatpush1.msra.mxu0 0.0
    %1038 = vmatprep.subr.mxu0 0.0
    %1039 = vmatpush1.msra.mxu0 0.0
    %1040 = vmatprep.subr.mxu0 0.0
    %1041 = vmatpush1.msra.mxu0 0.0
    %1042 = vmatprep.subr.mxu0 0.0
    %1043 = vmatpush1.msra.mxu0 0.0
    %1044 = vmatprep.subr.mxu0 0.0
    %1045 = vmatpush1.msra.mxu0 0.0
    %1046 = vmatprep.subr.mxu0 0.0
    %1047 = vmatpush1.msra.mxu0 0.0
    %1048 = vmatprep.subr.mxu0 0.0
    %1049 = vmatpush1.msra.mxu0 0.0
    %1050 = vmatprep.subr.mxu0 0.0
    %1051 = vmatpush1.msra.mxu0 0.0
    %1052 = vmatprep.subr.mxu0 0.0
    %1053 = vmatpush1.msra.mxu0 0.0
    %1054 = vmatprep.subr.mxu0 0.0
    %1055 = vmatpush1.msra.mxu0 0.0
    %1056 = vmatprep.subr.mxu0 0.0
    %1057 = vmatpush1.msra.mxu0 0.0
    %1058 = vmatprep.subr.mxu0 0.0
    %1059 = vmatpush1.msra.mxu0 0.0
    %1060 = vmatprep.subr.mxu0 0.0
    %1061 = vmatpush1.msra.mxu0 0.0
    %1062 = vmatprep.subr.mxu0 0.0
    %1063 = vmatpush1.msra.mxu0 0.0
    %1064 = vmatprep.subr.mxu0 0.0
    %1065 = vmatpush1.msra.mxu0 0.0
    %1066 = vmatprep.subr.mxu0 0.0
    %1067 = vmatpush1.msra.mxu0 0.0
    %1068 = vmatprep.mubr.f32.mxu0 0.0
    %1069 = vmatmul.mubr.f32.gmra.mrb[0].mxu0 %v1002
    %v1070 = vpop.f32.mrb[0].mxu0
    %v1071 = vadd.f32 0.0, %v1070
    %v1072 = vpop.f32.mrb[0].mxu0
    %1073 = vdwg.mxu0
    %v1074 = vadd.f32 %v192, %v972
    %v1075 = vmul.f32 %v1074, %v64
    %v1076 = vtanh.pop %v1075
    %v1077 = vmul.f32 %v1076, %v64
    %v1078 = vadd.f32 %v1077, %v65
    %v1079 = vmul.f32 %v1078, %v893
    %1081 = vrot.lane.b32.xlu0 %v1078, 64
    %v1082 = vpop.permute.xlu0 %1081
    %v1084 = vmul.f32 %v1078, %v1082
    %1086 = vrot.lane.b32.xlu0 %v1084, 32
    %v1087 = vpop.permute.xlu0 %1086
    %v1089 = vadd.f32 %v1079, %v1087
    %v1090 = vtanh.pop %v1089
    %1092 = vrot.lane.b32.xlu0 %v1090, 64
    %v1093 = vpop.permute.xlu0 %1092
    %v1095 = vmul.f32 %v1078, %v1093
    %1097 = vrot.lane.b32.xlu0 %v1095, 32
    %v1098 = vpop.permute.xlu0 %1097
    %v1099 = vsel %vm210, %v1098, 0
    %1101 = vmatprep.subr.mxu0 %v47
    %1102 = vmatpush1.msra.mxu0 %v46
    %1103 = vmatprep.subr.mxu0 %v49
    %1104 = vmatpush1.msra.mxu0 %v48
    %1105 = vmatprep.subr.mxu0 %v51
    %1106 = vmatpush1.msra.mxu0 %v50
    %1107 = vmatprep.subr.mxu0 %v53
    %1108 = vmatpush1.msra.mxu0 %v52
    %1109 = vmatprep.subr.mxu0 0.0
    %1110 = vmatpush1.msra.mxu0 0.0
    %1111 = vmatprep.subr.mxu0 0.0
    %1112 = vmatpush1.msra.mxu0 0.0
    %1113 = vmatprep.subr.mxu0 0.0
    %1114 = vmatpush1.msra.mxu0 0.0
    %1115 = vmatprep.subr.mxu0 0.0
    %1116 = vmatpush1.msra.mxu0 0.0
    %1117 = vmatprep.subr.mxu0 0.0
    %1118 = vmatpush1.msra.mxu0 0.0
    %1119 = vmatprep.subr.mxu0 0.0
    %1120 = vmatpush1.msra.mxu0 0.0
    %1121 = vmatprep.subr.mxu0 0.0
    %1122 = vmatpush1.msra.mxu0 0.0
    %1123 = vmatprep.subr.mxu0 0.0
    %1124 = vmatpush1.msra.mxu0 0.0
    %1125 = vmatprep.subr.mxu0 0.0
    %1126 = vmatpush1.msra.mxu0 0.0
    %1127 = vmatprep.subr.mxu0 0.0
    %1128 = vmatpush1.msra.mxu0 0.0
    %1129 = vmatprep.subr.mxu0 0.0
    %1130 = vmatpush1.msra.mxu0 0.0
    %1131 = vmatprep.subr.mxu0 0.0
    %1132 = vmatpush1.msra.mxu0 0.0
    %1133 = vmatprep.subr.mxu0 0.0
    %1134 = vmatpush1.msra.mxu0 0.0
    %1135 = vmatprep.subr.mxu0 0.0
    %1136 = vmatpush1.msra.mxu0 0.0
    %1137 = vmatprep.subr.mxu0 0.0
    %1138 = vmatpush1.msra.mxu0 0.0
    %1139 = vmatprep.subr.mxu0 0.0
    %1140 = vmatpush1.msra.mxu0 0.0
    %1141 = vmatprep.subr.mxu0 0.0
    %1142 = vmatpush1.msra.mxu0 0.0
    %1143 = vmatprep.subr.mxu0 0.0
    %1144 = vmatpush1.msra.mxu0 0.0
    %1145 = vmatprep.subr.mxu0 0.0
    %1146 = vmatpush1.msra.mxu0 0.0
    %1147 = vmatprep.subr.mxu0 0.0
    %1148 = vmatpush1.msra.mxu0 0.0
    %1149 = vmatprep.subr.mxu0 0.0
    %1150 = vmatpush1.msra.mxu0 0.0
    %1151 = vmatprep.subr.mxu0 0.0
    %1152 = vmatpush1.msra.mxu0 0.0
    %1153 = vmatprep.subr.mxu0 0.0
    %1154 = vmatpush1.msra.mxu0 0.0
    %1155 = vmatprep.subr.mxu0 0.0
    %1156 = vmatpush1.msra.mxu0 0.0
    %1157 = vmatprep.subr.mxu0 0.0
    %1158 = vmatpush1.msra.mxu0 0.0
    %1159 = vmatprep.subr.mxu0 0.0
    %1160 = vmatpush1.msra.mxu0 0.0
    %1161 = vmatprep.subr.mxu0 0.0
    %1162 = vmatpush1.msra.mxu0 0.0
    %1163 = vmatprep.subr.mxu0 0.0
    %1164 = vmatpush1.msra.mxu0 0.0
    %1165 = vmatprep.mubr.f32.mxu0 0.0
    %1166 = vmatmul.mubr.f32.gmra.mrb[0].mxu0 %v1099
    %v1167 = vpop.f32.mrb[0].mxu0
    %v1168 = vadd.f32 0.0, %v1167
    %v1169 = vpop.f32.mrb[0].mxu0
    %v1170 = vadd.f32 0.0, %v1169
    %1171 = vdwg.mxu0
    %v1172 = vadd.f32 %v1170, %v1071
    %v1173 = vadd.f32 %v1172, %v387
    %v1174 = vmul.f32 %v1173, %v64
    %v1175 = vtanh.pop %v1174
    %v1176 = vmul.f32 %v1175, %v64
    %v1177 = vadd.f32 %v1176, %v65
    %v1178 = vmul.f32 %v1177, %v992
    %1180 = vrot.lane.b32.xlu0 %v1177, 64
    %v1181 = vpop.permute.xlu0 %1180
    %v1183 = vmul.f32 %v1177, %v1181
    %1185 = vrot.lane.b32.xlu0 %v1183, 32
    %v1186 = vpop.permute.xlu0 %1185
    %v1188 = vadd.f32 %v1178, %v1186
    %v1189 = vtanh.pop %v1188
    %1191 = vrot.lane.b32.xlu0 %v1189, 64
    %v1192 = vpop.permute.xlu0 %1191
    %v1194 = vmul.f32 %v1177, %v1192
    %1196 = vrot.lane.b32.xlu0 %v1194, 32
    %v1197 = vpop.permute.xlu0 %1196
    %v1198 = vsel %vm210, %v1197, 0
    %1200 = vmatprep.subr.mxu0 0.0
    %1201 = vmatpush1.msra.mxu0 %v54
    %1202 = vmatprep.subr.mxu0 0.0
    %1203 = vmatpush1.msra.mxu0 %v55
    %1204 = vmatprep.subr.mxu0 0.0
    %1205 = vmatpush1.msra.mxu0 %v56
    %1206 = vmatprep.subr.mxu0 0.0
    %1207 = vmatpush1.msra.mxu0 %v57
    %1208 = vmatprep.subr.mxu0 0.0
    %1209 = vmatpush1.msra.mxu0 0.0
    %1210 = vmatprep.subr.mxu0 0.0
    %1211 = vmatpush1.msra.mxu0 0.0
    %1212 = vmatprep.subr.mxu0 0.0
    %1213 = vmatpush1.msra.mxu0 0.0
    %1214 = vmatprep.subr.mxu0 0.0
    %1215 = vmatpush1.msra.mxu0 0.0
    %1216 = vmatprep.subr.mxu0 0.0
    %1217 = vmatpush1.msra.mxu0 0.0
    %1218 = vmatprep.subr.mxu0 0.0
    %1219 = vmatpush1.msra.mxu0 0.0
    %1220 = vmatprep.subr.mxu0 0.0
    %1221 = vmatpush1.msra.mxu0 0.0
    %1222 = vmatprep.subr.mxu0 0.0
    %1223 = vmatpush1.msra.mxu0 0.0
    %1224 = vmatprep.subr.mxu0 0.0
    %1225 = vmatpush1.msra.mxu0 0.0
    %1226 = vmatprep.subr.mxu0 0.0
    %1227 = vmatpush1.msra.mxu0 0.0
    %1228 = vmatprep.subr.mxu0 0.0
    %1229 = vmatpush1.msra.mxu0 0.0
    %1230 = vmatprep.subr.mxu0 0.0
    %1231 = vmatpush1.msra.mxu0 0.0
    %1232 = vmatprep.subr.mxu0 0.0
    %1233 = vmatpush1.msra.mxu0 0.0
    %1234 = vmatprep.subr.mxu0 0.0
    %1235 = vmatpush1.msra.mxu0 0.0
    %1236 = vmatprep.subr.mxu0 0.0
    %1237 = vmatpush1.msra.mxu0 0.0
    %1238 = vmatprep.subr.mxu0 0.0
    %1239 = vmatpush1.msra.mxu0 0.0
    %1240 = vmatprep.subr.mxu0 0.0
    %1241 = vmatpush1.msra.mxu0 0.0
    %1242 = vmatprep.subr.mxu0 0.0
    %1243 = vmatpush1.msra.mxu0 0.0
    %1244 = vmatprep.subr.mxu0 0.0
    %1245 = vmatpush1.msra.mxu0 0.0
    %1246 = vmatprep.subr.mxu0 0.0
    %1247 = vmatpush1.msra.mxu0 0.0
    %1248 = vmatprep.subr.mxu0 0.0
    %1249 = vmatpush1.msra.mxu0 0.0
    %1250 = vmatprep.subr.mxu0 0.0
    %1251 = vmatpush1.msra.mxu0 0.0
    %1252 = vmatprep.subr.mxu0 0.0
    %1253 = vmatpush1.msra.mxu0 0.0
    %1254 = vmatprep.subr.mxu0 0.0
    %1255 = vmatpush1.msra.mxu0 0.0
    %1256 = vmatprep.subr.mxu0 0.0
    %1257 = vmatpush1.msra.mxu0 0.0
    %1258 = vmatprep.subr.mxu0 0.0
    %1259 = vmatpush1.msra.mxu0 0.0
    %1260 = vmatprep.subr.mxu0 0.0
    %1261 = vmatpush1.msra.mxu0 0.0
    %1262 = vmatprep.subr.mxu0 0.0
    %1263 = vmatpush1.msra.mxu0 0.0
    %1264 = vmatprep.mubr.f32.mxu0 0.0
    %1265 = vmatmul.mubr.f32.gmra.mrb[0].mxu0 %v1198
    %v1266 = vpop.f32.mrb[0].mxu0
    %v1267 = vadd.f32 0.0, %v1266
    %v1268 = vpop.f32.mrb[0].mxu0
    %1269 = vdwg.mxu0
    %v1270 = vadd.f32 %v197, %v1168
    %v1271 = vmul.f32 %v1270, %v64
    %v1272 = vtanh.pop %v1271
    %v1273 = vmul.f32 %v1272, %v64
    %v1274 = vadd.f32 %v1273, %v65
    %v1275 = vmul.f32 %v1274, %v1089
    %1277 = vrot.lane.b32.xlu0 %v1274, 64
    %v1278 = vpop.permute.xlu0 %1277
    %v1280 = vmul.f32 %v1274, %v1278
    %1282 = vrot.lane.b32.xlu0 %v1280, 32
    %v1283 = vpop.permute.xlu0 %1282
    %v1285 = vadd.f32 %v1275, %v1283
    %v1286 = vtanh.pop %v1285
    %1288 = vrot.lane.b32.xlu0 %v1286, 64
    %v1289 = vpop.permute.xlu0 %1288
    %v1291 = vmul.f32 %v1274, %v1289
    %1293 = vrot.lane.b32.xlu0 %v1291, 32
    %v1294 = vpop.permute.xlu0 %1293
    %v1295 = vsel %vm210, %v1294, 0
    %1297 = vmatprep.subr.mxu0 %v47
    %1298 = vmatpush1.msra.mxu0 %v46
    %1299 = vmatprep.subr.mxu0 %v49
    %1300 = vmatpush1.msra.mxu0 %v48
    %1301 = vmatprep.subr.mxu0 %v51
    %1302 = vmatpush1.msra.mxu0 %v50
    %1303 = vmatprep.subr.mxu0 %v53
    %1304 = vmatpush1.msra.mxu0 %v52
    %1305 = vmatprep.subr.mxu0 0.0
    %1306 = vmatpush1.msra.mxu0 0.0
    %1307 = vmatprep.subr.mxu0 0.0
    %1308 = vmatpush1.msra.mxu0 0.0
    %1309 = vmatprep.subr.mxu0 0.0
    %1310 = vmatpush1.msra.mxu0 0.0
    %1311 = vmatprep.subr.mxu0 0.0
    %1312 = vmatpush1.msra.mxu0 0.0
    %1313 = vmatprep.subr.mxu0 0.0
    %1314 = vmatpush1.msra.mxu0 0.0
    %1315 = vmatprep.subr.mxu0 0.0
    %1316 = vmatpush1.msra.mxu0 0.0
    %1317 = vmatprep.subr.mxu0 0.0
    %1318 = vmatpush1.msra.mxu0 0.0
    %1319 = vmatprep.subr.mxu0 0.0
    %1320 = vmatpush1.msra.mxu0 0.0
    %1321 = vmatprep.subr.mxu0 0.0
    %1322 = vmatpush1.msra.mxu0 0.0
    %1323 = vmatprep.subr.mxu0 0.0
    %1324 = vmatpush1.msra.mxu0 0.0
    %1325 = vmatprep.subr.mxu0 0.0
    %1326 = vmatpush1.msra.mxu0 0.0
    %1327 = vmatprep.subr.mxu0 0.0
    %1328 = vmatpush1.msra.mxu0 0.0
    %1329 = vmatprep.subr.mxu0 0.0
    %1330 = vmatpush1.msra.mxu0 0.0
    %1331 = vmatprep.subr.mxu0 0.0
    %1332 = vmatpush1.msra.mxu0 0.0
    %1333 = vmatprep.subr.mxu0 0.0
    %1334 = vmatpush1.msra.mxu0 0.0
    %1335 = vmatprep.subr.mxu0 0.0
    %1336 = vmatpush1.msra.mxu0 0.0
    %1337 = vmatprep.subr.mxu0 0.0
    %1338 = vmatpush1.msra.mxu0 0.0
    %1339 = vmatprep.subr.mxu0 0.0
    %1340 = vmatpush1.msra.mxu0 0.0
    %1341 = vmatprep.subr.mxu0 0.0
    %1342 = vmatpush1.msra.mxu0 0.0
    %1343 = vmatprep.subr.mxu0 0.0
    %1344 = vmatpush1.msra.mxu0 0.0
    %1345 = vmatprep.subr.mxu0 0.0
    %1346 = vmatpush1.msra.mxu0 0.0
    %1347 = vmatprep.subr.mxu0 0.0
    %1348 = vmatpush1.msra.mxu0 0.0
    %1349 = vmatprep.subr.mxu0 0.0
    %1350 = vmatpush1.msra.mxu0 0.0
    %1351 = vmatprep.subr.mxu0 0.0
    %1352 = vmatpush1.msra.mxu0 0.0
    %1353 = vmatprep.subr.mxu0 0.0
    %1354 = vmatpush1.msra.mxu0 0.0
    %1355 = vmatprep.subr.mxu0 0.0
    %1356 = vmatpush1.msra.mxu0 0.0
    %1357 = vmatprep.subr.mxu0 0.0
    %1358 = vmatpush1.msra.mxu0 0.0
    %1359 = vmatprep.subr.mxu0 0.0
    %1360 = vmatpush1.msra.mxu0 0.0
    %1361 = vmatprep.mubr.f32.mxu0 0.0
    %1362 = vmatmul.mubr.f32.gmra.mrb[0].mxu0 %v1295
    %v1363 = vpop.f32.mrb[0].mxu0
    %v1364 = vadd.f32 0.0, %v1363
    %v1365 = vpop.f32.mrb[0].mxu0
    %v1366 = vadd.f32 0.0, %v1365
    %1367 = vdwg.mxu0
    %v1368 = vadd.f32 %v1366, %v1267
    %v1369 = vadd.f32 %v1368, %v387
    %v1370 = vmul.f32 %v1369, %v64
    %v1371 = vtanh.pop %v1370
    %v1372 = vmul.f32 %v1371, %v64
    %v1373 = vadd.f32 %v1372, %v65
    %v1374 = vmul.f32 %v1373, %v1188
    %1376 = vrot.lane.b32.xlu0 %v1373, 64
    %v1377 = vpop.permute.xlu0 %1376
    %v1379 = vmul.f32 %v1373, %v1377
    %1381 = vrot.lane.b32.xlu0 %v1379, 32
    %v1382 = vpop.permute.xlu0 %1381
    %v1384 = vadd.f32 %v1374, %v1382
    %v1385 = vtanh.pop %v1384
    %1387 = vrot.lane.b32.xlu0 %v1385, 64
    %v1388 = vpop.permute.xlu0 %1387
    %v1390 = vmul.f32 %v1373, %v1388
    %1392 = vrot.lane.b32.xlu0 %v1390, 32
    %v1393 = vpop.permute.xlu0 %1392
    %v1394 = vsel %vm210, %v1393, 0
    %1396 = vmatprep.subr.mxu0 0.0
    %1397 = vmatpush1.msra.mxu0 %v54
    %1398 = vmatprep.subr.mxu0 0.0
    %1399 = vmatpush1.msra.mxu0 %v55
    %1400 = vmatprep.subr.mxu0 0.0
    %1401 = vmatpush1.msra.mxu0 %v56
    %1402 = vmatprep.subr.mxu0 0.0
    %1403 = vmatpush1.msra.mxu0 %v57
    %1404 = vmatprep.subr.mxu0 0.0
    %1405 = vmatpush1.msra.mxu0 0.0
    %1406 = vmatprep.subr.mxu0 0.0
    %1407 = vmatpush1.msra.mxu0 0.0
    %1408 = vmatprep.subr.mxu0 0.0
    %1409 = vmatpush1.msra.mxu0 0.0
    %1410 = vmatprep.subr.mxu0 0.0
    %1411 = vmatpush1.msra.mxu0 0.0
    %1412 = vmatprep.subr.mxu0 0.0
    %1413 = vmatpush1.msra.mxu0 0.0
    %1414 = vmatprep.subr.mxu0 0.0
    %1415 = vmatpush1.msra.mxu0 0.0
    %1416 = vmatprep.subr.mxu0 0.0
    %1417 = vmatpush1.msra.mxu0 0.0
    %1418 = vmatprep.subr.mxu0 0.0
    %1419 = vmatpush1.msra.mxu0 0.0
    %1420 = vmatprep.subr.mxu0 0.0
    %1421 = vmatpush1.msra.mxu0 0.0
    %1422 = vmatprep.subr.mxu0 0.0
    %1423 = vmatpush1.msra.mxu0 0.0
    %1424 = vmatprep.subr.mxu0 0.0
    %1425 = vmatpush1.msra.mxu0 0.0
    %1426 = vmatprep.subr.mxu0 0.0
    %1427 = vmatpush1.msra.mxu0 0.0
    %1428 = vmatprep.subr.mxu0 0.0
    %1429 = vmatpush1.msra.mxu0 0.0
    %1430 = vmatprep.subr.mxu0 0.0
    %1431 = vmatpush1.msra.mxu0 0.0
    %1432 = vmatprep.subr.mxu0 0.0
    %1433 = vmatpush1.msra.mxu0 0.0
    %1434 = vmatprep.subr.mxu0 0.0
    %1435 = vmatpush1.msra.mxu0 0.0
    %1436 = vmatprep.subr.mxu0 0.0
    %1437 = vmatpush1.msra.mxu0 0.0
    %1438 = vmatprep.subr.mxu0 0.0
    %1439 = vmatpush1.msra.mxu0 0.0
    %1440 = vmatprep.subr.mxu0 0.0
    %1441 = vmatpush1.msra.mxu0 0.0
    %1442 = vmatprep.subr.mxu0 0.0
    %1443 = vmatpush1.msra.mxu0 0.0
    %1444 = vmatprep.subr.mxu0 0.0
    %1445 = vmatpush1.msra.mxu0 0.0
    %1446 = vmatprep.subr.mxu0 0.0
    %1447 = vmatpush1.msra.mxu0 0.0
    %1448 = vmatprep.subr.mxu0 0.0
    %1449 = vmatpush1.msra.mxu0 0.0
    %1450 = vmatprep.subr.mxu0 0.0
    %1451 = vmatpush1.msra.mxu0 0.0
    %1452 = vmatprep.subr.mxu0 0.0
    %1453 = vmatpush1.msra.mxu0 0.0
    %1454 = vmatprep.subr.mxu0 0.0
    %1455 = vmatpush1.msra.mxu0 0.0
    %1456 = vmatprep.subr.mxu0 0.0
    %1457 = vmatpush1.msra.mxu0 0.0
    %1458 = vmatprep.subr.mxu0 0.0
    %1459 = vmatpush1.msra.mxu0 0.0
    %1460 = vmatprep.mubr.f32.mxu0 0.0
    %1461 = vmatmul.mubr.f32.gmra.mrb[0].mxu0 %v1394
    %v1462 = vpop.f32.mrb[0].mxu0
    %v1463 = vadd.f32 0.0, %v1462
    %v1464 = vpop.f32.mrb[0].mxu0
    %1465 = vdwg.mxu0
    %v1466 = vadd.f32 %v202, %v1364
    %v1467 = vmul.f32 %v1466, %v64
    %v1468 = vtanh.pop %v1467
    %v1469 = vmul.f32 %v1468, %v64
    %v1470 = vadd.f32 %v1469, %v65
    %v1471 = vmul.f32 %v1470, %v1285
    %1473 = vrot.lane.b32.xlu0 %v1470, 64
    %v1474 = vpop.permute.xlu0 %1473
    %v1476 = vmul.f32 %v1470, %v1474
    %1478 = vrot.lane.b32.xlu0 %v1476, 32
    %v1479 = vpop.permute.xlu0 %1478
    %v1481 = vadd.f32 %v1471, %v1479
    %v1482 = vtanh.pop %v1481
    %1484 = vrot.lane.b32.xlu0 %v1482, 64
    %v1485 = vpop.permute.xlu0 %1484
    %v1487 = vmul.f32 %v1470, %v1485
    %1489 = vrot.lane.b32.xlu0 %v1487, 32
    %v1490 = vpop.permute.xlu0 %1489
    %v1491 = vsel %vm210, %v1490, 0
    %1493 = vmatprep.subr.mxu0 %v47
    %1494 = vmatpush1.msra.mxu0 %v46
    %1495 = vmatprep.subr.mxu0 %v49
    %1496 = vmatpush1.msra.mxu0 %v48
    %1497 = vmatprep.subr.mxu0 %v51
    %1498 = vmatpush1.msra.mxu0 %v50
    %1499 = vmatprep.subr.mxu0 %v53
    %1500 = vmatpush1.msra.mxu0 %v52
    %1501 = vmatprep.subr.mxu0 0.0
    %1502 = vmatpush1.msra.mxu0 0.0
    %1503 = vmatprep.subr.mxu0 0.0
    %1504 = vmatpush1.msra.mxu0 0.0
    %1505 = vmatprep.subr.mxu0 0.0
    %1506 = vmatpush1.msra.mxu0 0.0
    %1507 = vmatprep.subr.mxu0 0.0
    %1508 = vmatpush1.msra.mxu0 0.0
    %1509 = vmatprep.subr.mxu0 0.0
    %1510 = vmatpush1.msra.mxu0 0.0
    %1511 = vmatprep.subr.mxu0 0.0
    %1512 = vmatpush1.msra.mxu0 0.0
    %1513 = vmatprep.subr.mxu0 0.0
    %1514 = vmatpush1.msra.mxu0 0.0
    %1515 = vmatprep.subr.mxu0 0.0
    %1516 = vmatpush1.msra.mxu0 0.0
    %1517 = vmatprep.subr.mxu0 0.0
    %1518 = vmatpush1.msra.mxu0 0.0
    %1519 = vmatprep.subr.mxu0 0.0
    %1520 = vmatpush1.msra.mxu0 0.0
    %1521 = vmatprep.subr.mxu0 0.0
    %1522 = vmatpush1.msra.mxu0 0.0
    %1523 = vmatprep.subr.mxu0 0.0
    %1524 = vmatpush1.msra.mxu0 0.0
    %1525 = vmatprep.subr.mxu0 0.0
    %1526 = vmatpush1.msra.mxu0 0.0
    %1527 = vmatprep.subr.mxu0 0.0
    %1528 = vmatpush1.msra.mxu0 0.0
    %1529 = vmatprep.subr.mxu0 0.0
    %1530 = vmatpush1.msra.mxu0 0.0
    %1531 = vmatprep.subr.mxu0 0.0
    %1532 = vmatpush1.msra.mxu0 0.0
    %1533 = vmatprep.subr.mxu0 0.0
    %1534 = vmatpush1.msra.mxu0 0.0
    %1535 = vmatprep.subr.mxu0 0.0
    %1536 = vmatpush1.msra.mxu0 0.0
    %1537 = vmatprep.subr.mxu0 0.0
    %1538 = vmatpush1.msra.mxu0 0.0
    %1539 = vmatprep.subr.mxu0 0.0
    %1540 = vmatpush1.msra.mxu0 0.0
    %1541 = vmatprep.subr.mxu0 0.0
    %1542 = vmatpush1.msra.mxu0 0.0
    %1543 = vmatprep.subr.mxu0 0.0
    %1544 = vmatpush1.msra.mxu0 0.0
    %1545 = vmatprep.subr.mxu0 0.0
    %1546 = vmatpush1.msra.mxu0 0.0
    %1547 = vmatprep.subr.mxu0 0.0
    %1548 = vmatpush1.msra.mxu0 0.0
    %1549 = vmatprep.subr.mxu0 0.0
    %1550 = vmatpush1.msra.mxu0 0.0
    %1551 = vmatprep.subr.mxu0 0.0
    %1552 = vmatpush1.msra.mxu0 0.0
    %1553 = vmatprep.subr.mxu0 0.0
    %1554 = vmatpush1.msra.mxu0 0.0
    %1555 = vmatprep.subr.mxu0 0.0
    %1556 = vmatpush1.msra.mxu0 0.0
    %1557 = vmatprep.mubr.f32.mxu0 0.0
    %1558 = vmatmul.mubr.f32.gmra.mrb[0].mxu0 %v1491
    %v1559 = vpop.f32.mrb[0].mxu0
    %v1560 = vadd.f32 0.0, %v1559
    %v1561 = vpop.f32.mrb[0].mxu0
    %v1562 = vadd.f32 0.0, %v1561
    %1563 = vdwg.mxu0
    %v1564 = vadd.f32 %v1562, %v1463
    %v1565 = vadd.f32 %v1564, %v387
    %v1566 = vmul.f32 %v1565, %v64
    %v1567 = vtanh.pop %v1566
    %v1568 = vmul.f32 %v1567, %v64
    %v1569 = vadd.f32 %v1568, %v65
    %v1570 = vmul.f32 %v1569, %v1384
    %1572 = vrot.lane.b32.xlu0 %v1569, 64
    %v1573 = vpop.permute.xlu0 %1572
    %v1575 = vmul.f32 %v1569, %v1573
    %1577 = vrot.lane.b32.xlu0 %v1575, 32
    %v1578 = vpop.permute.xlu0 %1577
    %v1580 = vadd.f32 %v1570, %v1578
    %v1581 = vtanh.pop %v1580
    %1583 = vrot.lane.b32.xlu0 %v1581, 64
    %v1584 = vpop.permute.xlu0 %1583
    %v1586 = vmul.f32 %v1569, %v1584
    %1588 = vrot.lane.b32.xlu0 %v1586, 32
    %v1589 = vpop.permute.xlu0 %1588
    %v1590 = vsel %vm210, %v1589, 0
    %1592 = vmatprep.subr.mxu0 0.0
    %1593 = vmatpush1.msra.mxu0 %v54
    %1594 = vmatprep.subr.mxu0 0.0
    %1595 = vmatpush1.msra.mxu0 %v55
    %1596 = vmatprep.subr.mxu0 0.0
    %1597 = vmatpush1.msra.mxu0 %v56
    %1598 = vmatprep.subr.mxu0 0.0
    %1599 = vmatpush1.msra.mxu0 %v57
    %1600 = vmatprep.subr.mxu0 0.0
    %1601 = vmatpush1.msra.mxu0 0.0
    %1602 = vmatprep.subr.mxu0 0.0
    %1603 = vmatpush1.msra.mxu0 0.0
    %1604 = vmatprep.subr.mxu0 0.0
    %1605 = vmatpush1.msra.mxu0 0.0
    %1606 = vmatprep.subr.mxu0 0.0
    %1607 = vmatpush1.msra.mxu0 0.0
    %1608 = vmatprep.subr.mxu0 0.0
    %1609 = vmatpush1.msra.mxu0 0.0
    %1610 = vmatprep.subr.mxu0 0.0
    %1611 = vmatpush1.msra.mxu0 0.0
    %1612 = vmatprep.subr.mxu0 0.0
    %1613 = vmatpush1.msra.mxu0 0.0
    %1614 = vmatprep.subr.mxu0 0.0
    %1615 = vmatpush1.msra.mxu0 0.0
    %1616 = vmatprep.subr.mxu0 0.0
    %1617 = vmatpush1.msra.mxu0 0.0
    %1618 = vmatprep.subr.mxu0 0.0
    %1619 = vmatpush1.msra.mxu0 0.0
    %1620 = vmatprep.subr.mxu0 0.0
    %1621 = vmatpush1.msra.mxu0 0.0
    %1622 = vmatprep.subr.mxu0 0.0
    %1623 = vmatpush1.msra.mxu0 0.0
    %1624 = vmatprep.subr.mxu0 0.0
    %1625 = vmatpush1.msra.mxu0 0.0
    %1626 = vmatprep.subr.mxu0 0.0
    %1627 = vmatpush1.msra.mxu0 0.0
    %1628 = vmatprep.subr.mxu0 0.0
    %1629 = vmatpush1.msra.mxu0 0.0
    %1630 = vmatprep.subr.mxu0 0.0
    %1631 = vmatpush1.msra.mxu0 0.0
    %1632 = vmatprep.subr.mxu0 0.0
    %1633 = vmatpush1.msra.mxu0 0.0
    %1634 = vmatprep.subr.mxu0 0.0
    %1635 = vmatpush1.msra.mxu0 0.0
    %1636 = vmatprep.subr.mxu0 0.0
    %1637 = vmatpush1.msra.mxu0 0.0
    %1638 = vmatprep.subr.mxu0 0.0
    %1639 = vmatpush1.msra.mxu0 0.0
    %1640 = vmatprep.subr.mxu0 0.0
    %1641 = vmatpush1.msra.mxu0 0.0
    %1642 = vmatprep.subr.mxu0 0.0
    %1643 = vmatpush1.msra.mxu0 0.0
    %1644 = vmatprep.subr.mxu0 0.0
    %1645 = vmatpush1.msra.mxu0 0.0
    %1646 = vmatprep.subr.mxu0 0.0
    %1647 = vmatpush1.msra.mxu0 0.0
    %1648 = vmatprep.subr.mxu0 0.0
    %1649 = vmatpush1.msra.mxu0 0.0
    %1650 = vmatprep.subr.mxu0 0.0
    %1651 = vmatpush1.msra.mxu0 0.0
    %1652 = vmatprep.subr.mxu0 0.0
    %1653 = vmatpush1.msra.mxu0 0.0
    %1654 = vmatprep.subr.mxu0 0.0
    %1655 = vmatpush1.msra.mxu0 0.0
    %1656 = vmatprep.mubr.f32.mxu0 0.0
    %1657 = vmatmul.mubr.f32.gmra.mrb[0].mxu0 %v1590
    %v1658 = vpop.f32.mrb[0].mxu0
    %v1659 = vadd.f32 0.0, %v1658
    %v1660 = vpop.f32.mrb[0].mxu0
    %1661 = vdwg.mxu0
    %v1662 = vadd.f32 %v207, %v1560
    %v1663 = vmul.f32 %v1662, %v64
    %v1664 = vtanh.pop %v1663
    %v1665 = vmul.f32 %v1664, %v64
    %v1666 = vadd.f32 %v1665, %v65
    %v1667 = vmul.f32 %v1666, %v1481
    %1669 = vrot.lane.b32.xlu0 %v1666, 64
    %v1670 = vpop.permute.xlu0 %1669
    %v1672 = vmul.f32 %v1666, %v1670
    %1674 = vrot.lane.b32.xlu0 %v1672, 32
    %v1675 = vpop.permute.xlu0 %1674
    %v1677 = vadd.f32 %v1667, %v1675
    %v1678 = vtanh.pop %v1677
    %1680 = vrot.lane.b32.xlu0 %v1678, 64
    %v1681 = vpop.permute.xlu0 %1680
    %v1683 = vmul.f32 %v1666, %v1681
    %1685 = vrot.lane.b32.xlu0 %v1683, 32
    %v1686 = vpop.permute.xlu0 %1685
    %v1687 = vsel %vm210, %v1686, 0
    %1689 = vmatprep.subr.mxu0 %v47
    %1690 = vmatpush1.msra.mxu0 %v46
    %1691 = vmatprep.subr.mxu0 %v49
    %1692 = vmatpush1.msra.mxu0 %v48
    %1693 = vmatprep.subr.mxu0 %v51
    %1694 = vmatpush1.msra.mxu0 %v50
    %1695 = vmatprep.subr.mxu0 %v53
    %1696 = vmatpush1.msra.mxu0 %v52
    %1697 = vmatprep.subr.mxu0 0.0
    %1698 = vmatpush1.msra.mxu0 0.0
    %1699 = vmatprep.subr.mxu0 0.0
    %1700 = vmatpush1.msra.mxu0 0.0
    %1701 = vmatprep.subr.mxu0 0.0
    %1702 = vmatpush1.msra.mxu0 0.0
    %1703 = vmatprep.subr.mxu0 0.0
    %1704 = vmatpush1.msra.mxu0 0.0
    %1705 = vmatprep.subr.mxu0 0.0
    %1706 = vmatpush1.msra.mxu0 0.0
    %1707 = vmatprep.subr.mxu0 0.0
    %1708 = vmatpush1.msra.mxu0 0.0
    %1709 = vmatprep.subr.mxu0 0.0
    %1710 = vmatpush1.msra.mxu0 0.0
    %1711 = vmatprep.subr.mxu0 0.0
    %1712 = vmatpush1.msra.mxu0 0.0
    %1713 = vmatprep.subr.mxu0 0.0
    %1714 = vmatpush1.msra.mxu0 0.0
    %1715 = vmatprep.subr.mxu0 0.0
    %1716 = vmatpush1.msra.mxu0 0.0
    %1717 = vmatprep.subr.mxu0 0.0
    %1718 = vmatpush1.msra.mxu0 0.0
    %1719 = vmatprep.subr.mxu0 0.0
    %1720 = vmatpush1.msra.mxu0 0.0
    %1721 = vmatprep.subr.mxu0 0.0
    %1722 = vmatpush1.msra.mxu0 0.0
    %1723 = vmatprep.subr.mxu0 0.0
    %1724 = vmatpush1.msra.mxu0 0.0
    %1725 = vmatprep.subr.mxu0 0.0
    %1726 = vmatpush1.msra.mxu0 0.0
    %1727 = vmatprep.subr.mxu0 0.0
    %1728 = vmatpush1.msra.mxu0 0.0
    %1729 = vmatprep.subr.mxu0 0.0
    %1730 = vmatpush1.msra.mxu0 0.0
    %1731 = vmatprep.subr.mxu0 0.0
    %1732 = vmatpush1.msra.mxu0 0.0
    %1733 = vmatprep.subr.mxu0 0.0
    %1734 = vmatpush1.msra.mxu0 0.0
    %1735 = vmatprep.subr.mxu0 0.0
    %1736 = vmatpush1.msra.mxu0 0.0
    %1737 = vmatprep.subr.mxu0 0.0
    %1738 = vmatpush1.msra.mxu0 0.0
    %1739 = vmatprep.subr.mxu0 0.0
    %1740 = vmatpush1.msra.mxu0 0.0
    %1741 = vmatprep.subr.mxu0 0.0
    %1742 = vmatpush1.msra.mxu0 0.0
    %1743 = vmatprep.subr.mxu0 0.0
    %1744 = vmatpush1.msra.mxu0 0.0
    %1745 = vmatprep.subr.mxu0 0.0
    %1746 = vmatpush1.msra.mxu0 0.0
    %1747 = vmatprep.subr.mxu0 0.0
    %1748 = vmatpush1.msra.mxu0 0.0
    %1749 = vmatprep.subr.mxu0 0.0
    %1750 = vmatpush1.msra.mxu0 0.0
    %1751 = vmatprep.subr.mxu0 0.0
    %1752 = vmatpush1.msra.mxu0 0.0
    %1753 = vmatprep.mubr.f32.mxu0 0.0
    %1754 = vmatmul.mubr.f32.gmra.mrb[0].mxu0 %v1687
    %v1755 = vpop.f32.mrb[0].mxu0
    %v1756 = vpop.f32.mrb[0].mxu0
    %v1757 = vadd.f32 0.0, %v1756
    %1758 = vdwg.mxu0
    %v1759 = vadd.f32 %v1757, %v1659
    %v1760 = vadd.f32 %v1759, %v387
    %v1761 = vmul.f32 %v1760, %v64
    %v1762 = vtanh.pop %v1761
    %v1763 = vmul.f32 %v1762, %v64
    %v1764 = vadd.f32 %v1763, %v65
    %v1765 = vmul.f32 %v1764, %v1580
    %1767 = vrot.lane.b32.xlu0 %v1764, 64
    %v1768 = vpop.permute.xlu0 %1767
    %v1770 = vmul.f32 %v1764, %v1768
    %1772 = vrot.lane.b32.xlu0 %v1770, 32
    %v1773 = vpop.permute.xlu0 %1772
    %v1775 = vadd.f32 %v1765, %v1773
    %v1776 = vtanh.pop %v1775
    %1778 = vrot.lane.b32.xlu0 %v1776, 64
    %v1779 = vpop.permute.xlu0 %1778
    %v1781 = vmul.f32 %v1764, %v1779
    %1783 = vrot.lane.b32.xlu0 %v1781, 32
    %v1784 = vpop.permute.xlu0 %1783
    %v1786 = vsel %vm210, %v1784, 0.0
    %1787 = vadd.xlane.f32.xlu0 %v1786
    %v1788 = vpop.xlane.xlu0 %1787
    %v1789 = vrcp.pop 32.0
    %v1790 = vmul.f32 %v1788, %v1789
    %v1791 = vsub.f32 %v1781, %v1790
    %v1792 = vmul.f32 %v1791, %v1791
    %1794 = vrot.lane.b32.xlu0 %v1792, 32
    %v1795 = vpop.permute.xlu0 %1794
    %v1797 = vsel %vm210, %v1795, 0.0
    %1798 = vadd.xlane.f32.xlu0 %v1797
    %v1799 = vpop.xlane.xlu0 %1798
    %v1800 = vmul.f32 %v1799, %v1789
    %v1801 = vadd.f32 %v1800, 1e-05
    %v1802 = vrsqrt.pop %v1801
    %v1803 = vmul.f32 %v1791, %v1802
    %v1804 = vld [vmem:[%s6] sm:$0x1]
    %v1806 = vlaneseq
    %v1807 = vshrl.u32 %v1806, 7
    %v1808 = vsub.s32 0, %v1807
    %v1809 = vrot.slane %v1804, %v1808
    %1810 = vrot.lane.b32.xlu0 %v1809, 96
    %v1811 = vpop.permute.xlu0 %1810
    %v1813 = vmul.f32 %v1803, %v1811
    %v1814 = vld [vmem:[%s7] sm:$0x1]
    %v1816 = vlaneseq
    %v1817 = vshrl.u32 %v1816, 7
    %v1818 = vsub.s32 0, %v1817
    %v1819 = vrot.slane %v1814, %v1818
    %1820 = vrot.lane.b32.xlu0 %v1819, 96
    %v1821 = vpop.permute.xlu0 %1820
    %v1823 = vadd.f32 %v1813, %v1821
    %1825 = vrot.lane.b32.xlu0 %v1823, 32
    %v1826 = vpop.permute.xlu0 %1825
    %1828 = vst.msk [vmem:[#allocation5] sm:$0xff] %vm210, %v1826
    // Predicated region
    $region38: #{tpu_custom_call.1} parent=1 // pred_check
      _
    $region39: #{tpu_custom_call.1} parent=1 // pred_check_branch
      %1830 = sbr.rel (0) target = $region41
    $region40: #{tpu_custom_call.1} parent=1 // pred_region
      %s1832 = ssub.s32 128, 128
      %1833 = vsyncadd [#allocation4], %s1832
      %s1835 = sshll.u32 [#allocation5], 4
      %s1836 = int_to_ptr.vmem [resolvable:$true] %s1835
      %1838 = dma.vmem_to_hbm [thread:$0]  %s1836, 128, %s8, [#allocation4]
    $region41: #{tpu_custom_call.1} parent=1 // pred_fallthru
      _
    // Predicated region
    $region42: #{tpu_custom_call.1} parent=1 // pred_check
      _
    $region43: #{tpu_custom_call.1} parent=1 // pred_check_branch
      %1840 = sbr.rel (0) target = $region45
    $region44: #{tpu_custom_call.1} parent=1 // pred_region
      %1841 = dma.done [#allocation4], 128
    $region45: #{tpu_custom_call.1} parent=1 // pred_fallthru
      _
    %1842 = vsyncpa [#allocation3], 1
    %1843 = vsyncpa [#allocation4], 1

</llo_original>
